<compile_context>
chip_gen: v6e
topology: v6e:2x2x1
jax: 0.10.0
libtpu: 0.0.40
codegen_flags: <defaults>
</compile_context>

<pallas_src>
import jax
import jax.numpy as jnp
from jax import lax
from jax.experimental import pallas as pl
from jax.experimental.pallas import tpu as pltpu

START_TAG_IDX = 0
STOP_TAG_IDX = 1
NEG = -10000.0
TAG_PAD = 128          # lane-dense padded tag dim for the emissions output
SUB = 8                # sublane alignment


# ----------------------------------------------------------------------------
# Single fused kernel: fwd+bwd LSTM (interleaved) + hidden2tag + CRF forward alg
# ----------------------------------------------------------------------------
def _fused_kernel(len_ref,                           # (BP, 1)   int32 lengths (0 = pad row)
                  x_ref,                             # (S*BP, E) bf16, row t*BP+b = x[b, t]
                  wih_f_ref, whh_f_ref, b_f_ref,     # (E,4H) bf16, (H,4H) f32, (1,4H) f32
                  wih_b_ref, whh_b_ref, b_b_ref,
                  wout_f_ref, wout_b_ref, bout_ref,  # (H,TP) f32, (H,TP) f32, (1,TP) f32
                  trans_ref,                         # (TK,TK) f32, NEG-padded beyond T
                  emis_ref,                          # out (S, BP, TP) f32
                  logz_ref,                          # out (BP, 1) f32
                  gxf_ref, gxb_ref):                 # scratch (S, BP, 4H) f32
    S, BP, TP = emis_ref.shape
    H = whh_f_ref.shape[0]
    TK = trans_ref.shape[0]

    lengths = len_ref[...]                           # (BP, 1) int32

    # ---- hoisted input projections: one bf16 MXU matmul per direction over ALL
    #      timesteps; only h_prev @ Whh stays on the serial recurrent path ----
    x = x_ref[...]                                   # (S*BP, E) bf16
    gxf_ref[...] = (jnp.dot(x, wih_f_ref[...], preferred_element_type=jnp.float32)
                    + b_f_ref[...]).reshape(S, BP, 4 * H)
    gxb_ref[...] = (jnp.dot(x, wih_b_ref[...], preferred_element_type=jnp.float32)
                    + b_b_ref[...]).reshape(S, BP, 4 * H)

    whh_f = whh_f_ref[...]
    whh_b = whh_b_ref[...]
    wout_f = wout_f_ref[...]
    wout_b = wout_b_ref[...]

    # bias-initialise the emissions; both directions accumulate into emis_ref below,
    # so padded timesteps / padded batch rows end up exactly bias-only (matches
    # pad_packed_sequence zeroing the LSTM output there).  Padded tag lanes stay 0.
    emis_ref[...] = jnp.broadcast_to(bout_ref[...][None, :, :], (S, BP, TP))

    def lstm_step(gx_t, h_prev, c_prev, whh, valid):
        gates = gx_t + jnp.dot(h_prev, whh, preferred_element_type=jnp.float32)
        i_g = jax.nn.sigmoid(gates[:, 0:H])
        f_g = jax.nn.sigmoid(gates[:, H:2 * H])
        g_g = jnp.tanh(gates[:, 2 * H:3 * H])
        o_g = jax.nn.sigmoid(gates[:, 3 * H:4 * H])
        c_new = f_g * c_prev + i_g * g_g
        h_new = o_g * jnp.tanh(c_new)
        # packed-sequence semantics: the recurrence only advances on valid steps
        c_out = jnp.where(valid, c_new, c_prev)
        h_out = jnp.where(valid, h_new, h_prev)
        return h_out, c_out

    zeros_bh = jnp.zeros((BP, H), jnp.float32)

    # ---- loop A: both recurrences interleaved (fwd at t=i, bwd at t=S-1-i);
    #      each direction accumulates its partial emission directly into emis_ref ----
    def recur_body(i, carry):
        h_f, c_f, h_b, c_b = carry
        tb = S - 1 - i
        valid_f = lengths > i                        # (BP, 1) bool, computed once per t
        valid_b = lengths > tb

        h_f, c_f = lstm_step(gxf_ref[i], h_f, c_f, whh_f, valid_f)
        h_f_out = jnp.where(valid_f, h_f, 0.0)       # pad_packed_sequence zeros pads
        emis_ref[i] = emis_ref[i] + jnp.dot(h_f_out, wout_f,
                                            preferred_element_type=jnp.float32)

        h_b, c_b = lstm_step(gxb_ref[tb], h_b, c_b, whh_b, valid_b)
        # h_b is exactly 0 at padded steps (masked recurrence from a zero init)
        emis_ref[tb] = emis_ref[tb] + jnp.dot(h_b, wout_b,
                                              preferred_element_type=jnp.float32)
        return h_f, c_f, h_b, c_b

    lax.fori_loop(0, S, recur_body, (zeros_bh, zeros_bh, zeros_bh, zeros_bh))

    # ---- loop B: CRF forward algorithm on the small TK-wide tag space ----
    trans = trans_ref[...]                                       # (TK, TK)
    trans3 = jnp.broadcast_to(trans[None, :, :], (BP, TK, TK))   # hoisted broadcast
    col = lax.broadcasted_iota(jnp.int32, (BP, TK), 1)
    alpha0 = jnp.where(col == START_TAG_IDX, 0.0, NEG).astype(jnp.float32)

    def crf_body(t, alpha):
        emit = emis_ref[t][:, :TK]                               # (BP, TK)
        # reference's mask line is a no-op, so every timestep contributes; emit[b, j]
        # is constant over k, so adding it after the logsumexp is identical algebra.
        scores = alpha[:, None, :] + trans3                      # (BP, TK, TK)
        m = jnp.max(scores, axis=2)                              # (BP, TK)
        s = jnp.sum(jnp.exp(scores - m[:, :, None]), axis=2)
        return emit + m + jnp.log(s)

    alpha = lax.fori_loop(0, S, crf_body, alpha0)

    a = alpha + trans[STOP_TAG_IDX:STOP_TAG_IDX + 1, :]          # (BP, TK)
    m2 = jnp.max(a, axis=1, keepdims=True)
    logz_ref[...] = m2 + jnp.log(jnp.sum(jnp.exp(a - m2), axis=1, keepdims=True))


# ----------------------------------------------------------------------------
# Full forward pass (glue in plain JAX, hot path in the fused kernel above)
# ----------------------------------------------------------------------------
def bilstm_crf_loss(params, sentences, tags, lengths):
    B, S = sentences.shape
    T = params["transitions"].shape[0]
    E = params["embedding"].shape[1]
    H = params["whh_f_t"].shape[0]
    BP = ((max(B, SUB) + SUB - 1) // SUB) * SUB      # batch padded to sublane multiple

    # embedding lookup (padding_idx=0 row is zero) -- gather stays in XLA glue
    embeds = jnp.take(params["embedding"], sentences, axis=0)            # (B, S, E)
    x = jnp.transpose(embeds, (1, 0, 2))                                 # (S, B, E)
    if BP != B:
        x = jnp.pad(x, ((0, 0), (0, BP - B), (0, 0)))                    # pad rows: 0
    x = x.reshape(S * BP, E).astype(jnp.bfloat16)

    len_p = jnp.zeros((BP, 1), jnp.int32).at[:B, 0].set(lengths.astype(jnp.int32))

    emis_sbt, logz = pl.pallas_call(
        _fused_kernel,
        out_shape=(jax.ShapeDtypeStruct((S, BP, TAG_PAD), jnp.float32),
                   jax.ShapeDtypeStruct((BP, 1), jnp.float32)),
        scratch_shapes=[pltpu.VMEM((S, BP, 4 * H), jnp.float32),
                        pltpu.VMEM((S, BP, 4 * H), jnp.float32)],
        compiler_params=pltpu.CompilerParams(vmem_limit_bytes=32 * 1024 * 1024),
    )(len_p, x,
      params["wih_f_t"].astype(jnp.bfloat16), params["whh_f_t"], params["b_f"],
      params["wih_b_t"].astype(jnp.bfloat16), params["whh_b_t"], params["b_b"],
      params["wout_f_t"], params["wout_b_t"], params["bout_p"],
      params["trans_small"])

    emissions = jnp.transpose(emis_sbt, (1, 0, 2))[:B, :, :T]            # (B, S, T)
    forward_score = logz[:B, 0]                                          # (B,)

    # ---- CRF gold score (small gathers; matches the reference, which sums over all
    #      seq_len positions including padded ones) ----
    transitions = params["transitions"]
    tags_ext = jnp.concatenate(
        [jnp.full((B, 1), START_TAG_IDX, dtype=jnp.int32), tags.astype(jnp.int32)],
        axis=1)                                                          # (B, S+1)
    cur = tags_ext[:, 1:]
    prev = tags_ext[:, :-1]
    emit_sc = jnp.take_along_axis(emissions, cur[:, :, None], axis=2)[:, :, 0]
    trans_sc = transitions[cur, prev]
    gold = jnp.sum(emit_sc + trans_sc, axis=1)
    last_tag = tags_ext[jnp.arange(B), lengths]
    gold = gold + transitions[STOP_TAG_IDX, last_tag]

    return jnp.mean(forward_score - gold)


def init_params(key, vocab_size, tagset_size, embedding_dim, hidden_dim):
    H = hidden_dim // 2
    TK = ((tagset_size + SUB - 1) // SUB) * SUB        # small CRF tag dim (mult of 8)
    ks = jax.random.split(key, 12)
    emb = jax.random.normal(ks[0], (vocab_size, embedding_dim)) * 0.1
    emb = emb.at[0].set(0.0)                                             # padding_idx=0

    def lstm_dir(k0, k1, k2, k3):
        wih = jax.random.normal(k0, (4 * H, embedding_dim)) * 0.05
        whh = jax.random.normal(k1, (4 * H, H)) * 0.05
        bih = jax.random.normal(k2, (4 * H,)) * 0.05
        bhh = jax.random.normal(k3, (4 * H,)) * 0.05
        return (wih.T.astype(jnp.float32),
                whh.T.astype(jnp.float32),
                (bih + bhh).reshape(1, 4 * H).astype(jnp.float32))

    wih_f_t, whh_f_t, b_f = lstm_dir(ks[1], ks[2], ks[3], ks[4])
    wih_b_t, whh_b_t, b_b = lstm_dir(ks[5], ks[6], ks[7], ks[8])

    wout = jax.random.normal(ks[9], (tagset_size, hidden_dim)) * 0.05    # (T, 2H)
    bout = jax.random.normal(ks[10], (tagset_size,)) * 0.05

    trans = jax.random.normal(ks[11], (tagset_size, tagset_size))
    trans = trans.at[:, START_TAG_IDX].set(NEG)
    trans = trans.at[STOP_TAG_IDX, :].set(NEG)

    # hidden2tag weight split per direction, padded lane-dense to TAG_PAD with zeros
    wout_f_t = jnp.zeros((H, TAG_PAD), jnp.float32).at[:, :tagset_size].set(
        wout[:, :H].T.astype(jnp.float32))
    wout_b_t = jnp.zeros((H, TAG_PAD), jnp.float32).at[:, :tagset_size].set(
        wout[:, H:].T.astype(jnp.float32))
    bout_p = jnp.zeros((1, TAG_PAD), jnp.float32).at[0, :tagset_size].set(
        bout.astype(jnp.float32))
    # CRF transitions padded only to the small TK (NEG so padded tags underflow to 0)
    trans_small = jnp.full((TK, TK), NEG, dtype=jnp.float32).at[
        :tagset_size, :tagset_size].set(trans.astype(jnp.float32))

    return dict(
        embedding=emb.astype(jnp.float32),
        wih_f_t=wih_f_t, whh_f_t=whh_f_t, b_f=b_f,
        wih_b_t=wih_b_t, whh_b_t=whh_b_t, b_b=b_b,
        wout_f_t=wout_f_t, wout_b_t=wout_b_t, bout_p=bout_p,
        transitions=trans.astype(jnp.float32),
        trans_small=trans_small,
    )


if __name__ == "__main__":
    vocab_size = 50
    tagset_size = 6
    embedding_dim = 128
    hidden_dim = 256
    B, S = 2, 8

    key = jax.random.PRNGKey(0)
    k_param, k_sent, k_tag = jax.random.split(key, 3)

    params = init_params(k_param, vocab_size, tagset_size, embedding_dim, hidden_dim)

    lengths = jnp.array([8, 5], dtype=jnp.int32)
    # pad_packed_sequence would shrink the seq dim if max(lengths) < S.
    assert int(jnp.max(lengths)) == S

    t_idx = jnp.arange(S)[None, :]
    valid = t_idx < lengths[:, None]

    sentences = jax.random.randint(k_sent, (B, S), 1, vocab_size, dtype=jnp.int32)
    sentences = jnp.where(valid, sentences, 0)                           # pad id = 0
    tags = jax.random.randint(k_tag, (B, S), 2, tagset_size, dtype=jnp.int32)
    tags = jnp.where(valid, tags, 0)

    loss_fn = jax.jit(bilstm_crf_loss)
    loss = loss_fn(params, sentences, tags, lengths)
    loss = jax.block_until_ready(loss)
    assert jnp.isfinite(loss)
    print("KERNEL_OK")
</pallas_src>

<mosaic_0001>
module attributes {stable_mosaic.version = 11 : i64} {
  func.func @_fused_kernel(%arg0: memref<8x1xi32, #tpu.memory_space<vmem>>, %arg1: memref<64x128xbf16, #tpu.memory_space<vmem>>, %arg2: memref<128x512xbf16, #tpu.memory_space<vmem>>, %arg3: memref<128x512xf32, #tpu.memory_space<vmem>>, %arg4: memref<1x512xf32, #tpu.memory_space<vmem>>, %arg5: memref<128x512xbf16, #tpu.memory_space<vmem>>, %arg6: memref<128x512xf32, #tpu.memory_space<vmem>>, %arg7: memref<1x512xf32, #tpu.memory_space<vmem>>, %arg8: memref<128x128xf32, #tpu.memory_space<vmem>>, %arg9: memref<128x128xf32, #tpu.memory_space<vmem>>, %arg10: memref<1x128xf32, #tpu.memory_space<vmem>>, %arg11: memref<8x8xf32, #tpu.memory_space<vmem>>, %arg12: memref<8x8x128xf32, #tpu.memory_space<vmem>>, %arg13: memref<8x1xf32, #tpu.memory_space<vmem>>, %arg14: memref<8x8x512xf32, #tpu.memory_space<vmem>>, %arg15: memref<8x8x512xf32, #tpu.memory_space<vmem>>) attributes {dimension_semantics = [], scalar_prefetch = 0 : i64, scratch_operands = 2 : i64, tpu.core_type = #tpu.core_type<tc>} {
    %c0 = arith.constant 0 : index
    %c0_0 = arith.constant 0 : index
    %0 = vector.load %arg0[%c0, %c0_0] : memref<8x1xi32, #tpu.memory_space<vmem>>, vector<8x1xi32>
    %c0_1 = arith.constant 0 : index
    %c0_2 = arith.constant 0 : index
    %1 = vector.load %arg1[%c0_1, %c0_2] : memref<64x128xbf16, #tpu.memory_space<vmem>>, vector<64x128xbf16>
    %c0_3 = arith.constant 0 : index
    %c0_4 = arith.constant 0 : index
    %2 = vector.load %arg2[%c0_3, %c0_4] : memref<128x512xbf16, #tpu.memory_space<vmem>>, vector<128x512xbf16>
    %cst = arith.constant dense<0.000000e+00> : vector<64x512xf32>
    %3 = tpu.matmul %1, %2, %cst {dimension_numbers = #tpu.dot_dimension_numbers<[1], [0], [0], [1], [0, 0, 1, 1], [], []>} : vector<64x128xbf16>, vector<128x512xbf16>, vector<64x512xf32> -> vector<64x512xf32>
    %c0_5 = arith.constant 0 : index
    %c0_6 = arith.constant 0 : index
    %4 = vector.load %arg4[%c0_5, %c0_6] : memref<1x512xf32, #tpu.memory_space<vmem>>, vector<1x512xf32>
    %5 = vector.broadcast %4 : vector<1x512xf32> to vector<64x512xf32>
    %6 = arith.addf %3, %5 : vector<64x512xf32>
    %7 = vector.shape_cast %6 : vector<64x512xf32> to vector<8x8x512xf32>
    %c0_7 = arith.constant 0 : index
    %c0_8 = arith.constant 0 : index
    %c0_9 = arith.constant 0 : index
    %8 = vector.load %arg14[%c0_7, %c0_8, %c0_9] : memref<8x8x512xf32, #tpu.memory_space<vmem>>, vector<8x8x512xf32>
    tpu.vector_store %arg14[%c0_7, %c0_8, %c0_9], %7 {strides = array<i32>} : memref<8x8x512xf32, #tpu.memory_space<vmem>>, vector<8x8x512xf32>,
    %c0_10 = arith.constant 0 : index
    %c0_11 = arith.constant 0 : index
    %9 = vector.load %arg5[%c0_10, %c0_11] : memref<128x512xbf16, #tpu.memory_space<vmem>>, vector<128x512xbf16>
    %cst_12 = arith.constant dense<0.000000e+00> : vector<64x512xf32>
    %10 = tpu.matmul %1, %9, %cst_12 {dimension_numbers = #tpu.dot_dimension_numbers<[1], [0], [0], [1], [0, 0, 1, 1], [], []>} : vector<64x128xbf16>, vector<128x512xbf16>, vector<64x512xf32> -> vector<64x512xf32>
    %c0_13 = arith.constant 0 : index
    %c0_14 = arith.constant 0 : index
    %11 = vector.load %arg7[%c0_13, %c0_14] : memref<1x512xf32, #tpu.memory_space<vmem>>, vector<1x512xf32>
    %12 = vector.broadcast %11 : vector<1x512xf32> to vector<64x512xf32>
    %13 = arith.addf %10, %12 : vector<64x512xf32>
    %14 = vector.shape_cast %13 : vector<64x512xf32> to vector<8x8x512xf32>
    %c0_15 = arith.constant 0 : index
    %c0_16 = arith.constant 0 : index
    %c0_17 = arith.constant 0 : index
    %15 = vector.load %arg15[%c0_15, %c0_16, %c0_17] : memref<8x8x512xf32, #tpu.memory_space<vmem>>, vector<8x8x512xf32>
    tpu.vector_store %arg15[%c0_15, %c0_16, %c0_17], %14 {strides = array<i32>} : memref<8x8x512xf32, #tpu.memory_space<vmem>>, vector<8x8x512xf32>,
    %c0_18 = arith.constant 0 : index
    %c0_19 = arith.constant 0 : index
    %16 = vector.load %arg3[%c0_18, %c0_19] : memref<128x512xf32, #tpu.memory_space<vmem>>, vector<128x512xf32>
    %c0_20 = arith.constant 0 : index
    %c0_21 = arith.constant 0 : index
    %17 = vector.load %arg6[%c0_20, %c0_21] : memref<128x512xf32, #tpu.memory_space<vmem>>, vector<128x512xf32>
    %c0_22 = arith.constant 0 : index
    %c0_23 = arith.constant 0 : index
    %18 = vector.load %arg8[%c0_22, %c0_23] : memref<128x128xf32, #tpu.memory_space<vmem>>, vector<128x128xf32>
    %c0_24 = arith.constant 0 : index
    %c0_25 = arith.constant 0 : index
    %19 = vector.load %arg9[%c0_24, %c0_25] : memref<128x128xf32, #tpu.memory_space<vmem>>, vector<128x128xf32>
    %c0_26 = arith.constant 0 : index
    %c0_27 = arith.constant 0 : index
    %20 = vector.load %arg10[%c0_26, %c0_27] : memref<1x128xf32, #tpu.memory_space<vmem>>, vector<1x128xf32>
    %21 = vector.shape_cast %20 : vector<1x128xf32> to vector<1x1x128xf32>
    %22 = vector.shape_cast %21 : vector<1x1x128xf32> to vector<1x1x128xf32>
    %23 = vector.broadcast %22 : vector<1x1x128xf32> to vector<8x8x128xf32>
    %c0_28 = arith.constant 0 : index
    %c0_29 = arith.constant 0 : index
    %c0_30 = arith.constant 0 : index
    %24 = vector.load %arg12[%c0_28, %c0_29, %c0_30] : memref<8x8x128xf32, #tpu.memory_space<vmem>>, vector<8x8x128xf32>
    tpu.vector_store %arg12[%c0_28, %c0_29, %c0_30], %23 {strides = array<i32>} : memref<8x8x128xf32, #tpu.memory_space<vmem>>, vector<8x8x128xf32>,
    %cst_31 = arith.constant 0.000000e+00 : f32
    %25 = vector.broadcast %cst_31 : f32 to vector<8x128xf32>
    %c0_i32 = arith.constant 0 : i32
    %c8_i32 = arith.constant 8 : i32
    %26 = arith.addi %c0_i32, %c8_i32 : i32
    %c1_i32 = arith.constant 1 : i32
    %27:4 = scf.for %arg16 = %c0_i32 to %26 step %c1_i32 iter_args(%arg17 = %25, %arg18 = %25, %arg19 = %25, %arg20 = %25) -> (vector<8x128xf32>, vector<8x128xf32>, vector<8x128xf32>, vector<8x128xf32>)  : i32 {
      %c7_i32 = arith.constant 7 : i32
      %53 = arith.subi %c7_i32, %arg16 : i32
      %54 = vector.broadcast %arg16 : i32 to vector<8x1xi32>
      %55 = arith.cmpi sgt, %0, %54 : vector<8x1xi32>
      %56 = vector.broadcast %53 : i32 to vector<8x1xi32>
      %57 = arith.cmpi sgt, %0, %56 : vector<8x1xi32>
      %58 = arith.index_cast %arg16 : i32 to index
      %c0_46 = arith.constant 0 : index
      %c0_47 = arith.constant 0 : index
      %59 = vector.load %arg14[%58, %c0_46, %c0_47] : memref<8x8x512xf32, #tpu.memory_space<vmem>>, vector<1x8x512xf32>
      %60 = vector.shape_cast %59 : vector<1x8x512xf32> to vector<8x512xf32>
      %cst_48 = arith.constant dense<0.000000e+00> : vector<8x512xf32>
      %61 = tpu.matmul %arg17, %16, %cst_48 {dimension_numbers = #tpu.dot_dimension_numbers<[1], [0], [0], [1], [0, 0, 1, 1], [], []>} : vector<8x128xf32>, vector<128x512xf32>, vector<8x512xf32> -> vector<8x512xf32>
      %62 = arith.addf %60, %61 : vector<8x512xf32>
      %63 = vector.extract_strided_slice %62 {offsets = [0, 0], sizes = [8, 128], strides = [1, 1]} : vector<8x512xf32> to vector<8x128xf32>
      %64 = arith.negf %63 : vector<8x128xf32>
      %65 = math.exp %64 : vector<8x128xf32>
      %cst_49 = arith.constant 1.000000e+00 : f32
      %66 = vector.broadcast %cst_49 : f32 to vector<8x128xf32>
      %67 = arith.addf %66, %65 : vector<8x128xf32>
      %68 = arith.divf %66, %67 : vector<8x128xf32>
      %69 = vector.extract_strided_slice %62 {offsets = [0, 128], sizes = [8, 128], strides = [1, 1]} : vector<8x512xf32> to vector<8x128xf32>
      %70 = arith.negf %69 : vector<8x128xf32>
      %71 = math.exp %70 : vector<8x128xf32>
      %cst_50 = arith.constant 1.000000e+00 : f32
      %72 = vector.broadcast %cst_50 : f32 to vector<8x128xf32>
      %73 = arith.addf %72, %71 : vector<8x128xf32>
      %74 = arith.divf %72, %73 : vector<8x128xf32>
      %75 = vector.extract_strided_slice %62 {offsets = [0, 256], sizes = [8, 128], strides = [1, 1]} : vector<8x512xf32> to vector<8x128xf32>
      %76 = math.tanh %75 : vector<8x128xf32>
      %77 = vector.extract_strided_slice %62 {offsets = [0, 384], sizes = [8, 128], strides = [1, 1]} : vector<8x512xf32> to vector<8x128xf32>
      %78 = arith.negf %77 : vector<8x128xf32>
      %79 = math.exp %78 : vector<8x128xf32>
      %cst_51 = arith.constant 1.000000e+00 : f32
      %80 = vector.broadcast %cst_51 : f32 to vector<8x128xf32>
      %81 = arith.addf %80, %79 : vector<8x128xf32>
      %82 = arith.divf %80, %81 : vector<8x128xf32>
      %83 = arith.mulf %74, %arg18 : vector<8x128xf32>
      %84 = arith.mulf %68, %76 : vector<8x128xf32>
      %85 = arith.addf %83, %84 : vector<8x128xf32>
      %86 = math.tanh %85 : vector<8x128xf32>
      %87 = arith.mulf %82, %86 : vector<8x128xf32>
      %88 = vector.shape_cast %55 : vector<8x1xi1> to vector<8x1xi1>
      %89 = vector.broadcast %88 : vector<8x1xi1> to vector<8x128xi1>
      %90 = arith.select %89, %85, %arg18 : vector<8x128xi1>, vector<8x128xf32>
      %91 = vector.shape_cast %55 : vector<8x1xi1> to vector<8x1xi1>
      %92 = vector.broadcast %91 : vector<8x1xi1> to vector<8x128xi1>
      %93 = arith.select %92, %87, %arg17 : vector<8x128xi1>, vector<8x128xf32>
      %cst_52 = arith.constant 0.000000e+00 : f32
      %94 = vector.shape_cast %55 : vector<8x1xi1> to vector<8x1xi1>
      %95 = vector.broadcast %94 : vector<8x1xi1> to vector<8x128xi1>
      %96 = vector.broadcast %cst_52 : f32 to vector<8x128xf32>
      %97 = arith.select %95, %93, %96 : vector<8x128xi1>, vector<8x128xf32>
      %98 = arith.index_cast %arg16 : i32 to index
      %c0_53 = arith.constant 0 : index
      %c0_54 = arith.constant 0 : index
      %99 = vector.load %arg12[%98, %c0_53, %c0_54] : memref<8x8x128xf32, #tpu.memory_space<vmem>>, vector<1x8x128xf32>
      %100 = vector.shape_cast %99 : vector<1x8x128xf32> to vector<8x128xf32>
      %cst_55 = arith.constant dense<0.000000e+00> : vector<8x128xf32>
      %101 = tpu.matmul %97, %18, %cst_55 {dimension_numbers = #tpu.dot_dimension_numbers<[1], [0], [0], [1], [0, 0, 1, 1], [], []>} : vector<8x128xf32>, vector<128x128xf32>, vector<8x128xf32> -> vector<8x128xf32>
      %102 = arith.addf %100, %101 : vector<8x128xf32>
      %103 = arith.index_cast %arg16 : i32 to index
      %c0_56 = arith.constant 0 : index
      %c0_57 = arith.constant 0 : index
      %104 = vector.load %arg12[%103, %c0_56, %c0_57] : memref<8x8x128xf32, #tpu.memory_space<vmem>>, vector<1x8x128xf32>
      %105 = vector.shape_cast %104 : vector<1x8x128xf32> to vector<8x128xf32>
      %106 = vector.shape_cast %102 : vector<8x128xf32> to vector<1x8x128xf32>
      tpu.vector_store %arg12[%103, %c0_56, %c0_57], %106 {strides = array<i32>} : memref<8x8x128xf32, #tpu.memory_space<vmem>>, vector<1x8x128xf32>,
      %107 = arith.index_cast %53 : i32 to index
      %c0_58 = arith.constant 0 : index
      %c0_59 = arith.constant 0 : index
      %108 = vector.load %arg15[%107, %c0_58, %c0_59] : memref<8x8x512xf32, #tpu.memory_space<vmem>>, vector<1x8x512xf32>
      %109 = vector.shape_cast %108 : vector<1x8x512xf32> to vector<8x512xf32>
      %cst_60 = arith.constant dense<0.000000e+00> : vector<8x512xf32>
      %110 = tpu.matmul %arg19, %17, %cst_60 {dimension_numbers = #tpu.dot_dimension_numbers<[1], [0], [0], [1], [0, 0, 1, 1], [], []>} : vector<8x128xf32>, vector<128x512xf32>, vector<8x512xf32> -> vector<8x512xf32>
      %111 = arith.addf %109, %110 : vector<8x512xf32>
      %112 = vector.extract_strided_slice %111 {offsets = [0, 0], sizes = [8, 128], strides = [1, 1]} : vector<8x512xf32> to vector<8x128xf32>
      %113 = arith.negf %112 : vector<8x128xf32>
      %114 = math.exp %113 : vector<8x128xf32>
      %cst_61 = arith.constant 1.000000e+00 : f32
      %115 = vector.broadcast %cst_61 : f32 to vector<8x128xf32>
      %116 = arith.addf %115, %114 : vector<8x128xf32>
      %117 = arith.divf %115, %116 : vector<8x128xf32>
      %118 = vector.extract_strided_slice %111 {offsets = [0, 128], sizes = [8, 128], strides = [1, 1]} : vector<8x512xf32> to vector<8x128xf32>
      %119 = arith.negf %118 : vector<8x128xf32>
      %120 = math.exp %119 : vector<8x128xf32>
      %cst_62 = arith.constant 1.000000e+00 : f32
      %121 = vector.broadcast %cst_62 : f32 to vector<8x128xf32>
      %122 = arith.addf %121, %120 : vector<8x128xf32>
      %123 = arith.divf %121, %122 : vector<8x128xf32>
      %124 = vector.extract_strided_slice %111 {offsets = [0, 256], sizes = [8, 128], strides = [1, 1]} : vector<8x512xf32> to vector<8x128xf32>
      %125 = math.tanh %124 : vector<8x128xf32>
      %126 = vector.extract_strided_slice %111 {offsets = [0, 384], sizes = [8, 128], strides = [1, 1]} : vector<8x512xf32> to vector<8x128xf32>
      %127 = arith.negf %126 : vector<8x128xf32>
      %128 = math.exp %127 : vector<8x128xf32>
      %cst_63 = arith.constant 1.000000e+00 : f32
      %129 = vector.broadcast %cst_63 : f32 to vector<8x128xf32>
      %130 = arith.addf %129, %128 : vector<8x128xf32>
      %131 = arith.divf %129, %130 : vector<8x128xf32>
      %132 = arith.mulf %123, %arg20 : vector<8x128xf32>
      %133 = arith.mulf %117, %125 : vector<8x128xf32>
      %134 = arith.addf %132, %133 : vector<8x128xf32>
      %135 = math.tanh %134 : vector<8x128xf32>
      %136 = arith.mulf %131, %135 : vector<8x128xf32>
      %137 = vector.shape_cast %57 : vector<8x1xi1> to vector<8x1xi1>
      %138 = vector.broadcast %137 : vector<8x1xi1> to vector<8x128xi1>
      %139 = arith.select %138, %134, %arg20 : vector<8x128xi1>, vector<8x128xf32>
      %140 = vector.shape_cast %57 : vector<8x1xi1> to vector<8x1xi1>
      %141 = vector.broadcast %140 : vector<8x1xi1> to vector<8x128xi1>
      %142 = arith.select %141, %136, %arg19 : vector<8x128xi1>, vector<8x128xf32>
      %143 = arith.index_cast %53 : i32 to index
      %c0_64 = arith.constant 0 : index
      %c0_65 = arith.constant 0 : index
      %144 = vector.load %arg12[%143, %c0_64, %c0_65] : memref<8x8x128xf32, #tpu.memory_space<vmem>>, vector<1x8x128xf32>
      %145 = vector.shape_cast %144 : vector<1x8x128xf32> to vector<8x128xf32>
      %cst_66 = arith.constant dense<0.000000e+00> : vector<8x128xf32>
      %146 = tpu.matmul %142, %19, %cst_66 {dimension_numbers = #tpu.dot_dimension_numbers<[1], [0], [0], [1], [0, 0, 1, 1], [], []>} : vector<8x128xf32>, vector<128x128xf32>, vector<8x128xf32> -> vector<8x128xf32>
      %147 = arith.addf %145, %146 : vector<8x128xf32>
      %148 = arith.index_cast %53 : i32 to index
      %c0_67 = arith.constant 0 : index
      %c0_68 = arith.constant 0 : index
      %149 = vector.load %arg12[%148, %c0_67, %c0_68] : memref<8x8x128xf32, #tpu.memory_space<vmem>>, vector<1x8x128xf32>
      %150 = vector.shape_cast %149 : vector<1x8x128xf32> to vector<8x128xf32>
      %151 = vector.shape_cast %147 : vector<8x128xf32> to vector<1x8x128xf32>
      tpu.vector_store %arg12[%148, %c0_67, %c0_68], %151 {strides = array<i32>} : memref<8x8x128xf32, #tpu.memory_space<vmem>>, vector<1x8x128xf32>,
      scf.yield %93, %90, %142, %139 : vector<8x128xf32>, vector<8x128xf32>, vector<8x128xf32>, vector<8x128xf32>
    }
    %c8_i32_32 = arith.constant 8 : i32
    %c0_33 = arith.constant 0 : index
    %c0_34 = arith.constant 0 : index
    %28 = vector.load %arg11[%c0_33, %c0_34] : memref<8x8xf32, #tpu.memory_space<vmem>>, vector<8x8xf32>
    %29 = vector.shape_cast %28 : vector<8x8xf32> to vector<1x8x8xf32>
    %30 = vector.shape_cast %29 : vector<1x8x8xf32> to vector<1x8x8xf32>
    %31 = vector.broadcast %30 : vector<1x8x8xf32> to vector<8x8x8xf32>
    %32 = tpu.iota {dimensions = array<i32: 1>} : vector<8x8xi32>
    %c0_i32_35 = arith.constant 0 : i32
    %33 = vector.broadcast %c0_i32_35 : i32 to vector<8x8xi32>
    %34 = arith.cmpi eq, %32, %33 : vector<8x8xi32>
    %cst_36 = arith.constant 0.000000e+00 : f32
    %cst_37 = arith.constant -1.000000e+04 : f32
    %35 = vector.broadcast %cst_36 : f32 to vector<8x8xf32>
    %36 = vector.broadcast %cst_37 : f32 to vector<8x8xf32>
    %37 = arith.select %34, %35, %36 : vector<8x8xi1>, vector<8x8xf32>
    %c0_i32_38 = arith.constant 0 : i32
    %c8_i32_39 = arith.constant 8 : i32
    %38 = arith.addi %c0_i32_38, %c8_i32_39 : i32
    %c1_i32_40 = arith.constant 1 : i32
    %39 = scf.for %arg16 = %c0_i32_38 to %38 step %c1_i32_40 iter_args(%arg17 = %37) -> (vector<8x8xf32>)  : i32 {
      %53 = arith.index_cast %arg16 : i32 to index
      %c0_46 = arith.constant 0 : index
      %c0_47 = arith.constant 0 : index
      %54 = vector.load %arg12[%53, %c0_46, %c0_47] : memref<8x8x128xf32, #tpu.memory_space<vmem>>, vector<1x8x128xf32>
      %55 = vector.shape_cast %54 : vector<1x8x128xf32> to vector<8x128xf32>
      %56 = vector.extract_strided_slice %55 {offsets = [0, 0], sizes = [8, 8], strides = [1, 1]} : vector<8x128xf32> to vector<8x8xf32>
      %57 = vector.shape_cast %arg17 : vector<8x8xf32> to vector<8x1x8xf32>
      %58 = vector.broadcast %57 : vector<8x1x8xf32> to vector<8x8x8xf32>
      %59 = arith.addf %58, %31 : vector<8x8x8xf32>
      %cst_48 = arith.constant dense<0xFF800000> : vector<8x8xf32>
      %60 = vector.multi_reduction <maximumf>, %59, %cst_48 [2] : vector<8x8x8xf32> to vector<8x8xf32>
      %61 = vector.shape_cast %60 : vector<8x8xf32> to vector<8x8x1xf32>
      %62 = vector.broadcast %61 : vector<8x8x1xf32> to vector<8x8x8xf32>
      %63 = arith.subf %59, %62 : vector<8x8x8xf32>
      %64 = math.exp %63 : vector<8x8x8xf32>
      %cst_49 = arith.constant dense<0.000000e+00> : vector<8x8xf32>
      %65 = vector.multi_reduction <add>, %64, %cst_49 [2] : vector<8x8x8xf32> to vector<8x8xf32>
      %66 = arith.addf %56, %60 : vector<8x8xf32>
      %67 = math.log %65 : vector<8x8xf32>
      %68 = arith.addf %66, %67 : vector<8x8xf32>
      scf.yield %68 : vector<8x8xf32>
    }
    %c8_i32_41 = arith.constant 8 : i32
    %40 = vector.extract_strided_slice %28 {offsets = [1, 0], sizes = [1, 8], strides = [1, 1]} : vector<8x8xf32> to vector<1x8xf32>
    %41 = vector.broadcast %40 : vector<1x8xf32> to vector<8x8xf32>
    %42 = arith.addf %39, %41 : vector<8x8xf32>
    %cst_42 = arith.constant dense<0xFF800000> : vector<8xf32>
    %43 = vector.multi_reduction <maximumf>, %42, %cst_42 [1] : vector<8x8xf32> to vector<8xf32>
    %44 = vector.shape_cast %43 : vector<8xf32> to vector<8x1xf32>
    %45 = vector.broadcast %44 : vector<8x1xf32> to vector<8x8xf32>
    %46 = arith.subf %42, %45 : vector<8x8xf32>
    %47 = math.exp %46 : vector<8x8xf32>
    %cst_43 = arith.constant dense<0.000000e+00> : vector<8xf32>
    %48 = vector.multi_reduction <add>, %47, %cst_43 [1] : vector<8x8xf32> to vector<8xf32>
    %49 = vector.shape_cast %48 : vector<8xf32> to vector<8x1xf32>
    %50 = math.log %49 : vector<8x1xf32>
    %51 = arith.addf %44, %50 : vector<8x1xf32>
    %c0_44 = arith.constant 0 : index
    %c0_45 = arith.constant 0 : index
    %52 = vector.load %arg13[%c0_44, %c0_45] : memref<8x1xf32, #tpu.memory_space<vmem>>, vector<8x1xf32>
    tpu.vector_store %arg13[%c0_44, %c0_45], %51 {strides = array<i32>} : memref<8x1xf32, #tpu.memory_space<vmem>>, vector<8x1xf32>,
    return
  }
}

</mosaic_0001>

<llo_original>
// kernel: bilstm_crf_loss.1
$region0: #{bilstm_crf_loss.1}
  #allocation0 [shape = 'u32[]', space=smem, size = 0x4, offset = 0x4, fixed_abs, tag = 'smem constant byte address 0x4 - core index']
  #allocation1 [shape = 'u32[144,128]{1,0:T(1,128)}', space=vmem, size = 0x12000, scoped, tag = 'internal scratch']
  #allocation2 [shape = 'f32[8,8,512]{2,1,0:T(8,128)}', space=vmem, size = 0x20000, scoped, tag = 'scratch operand']
  #allocation3 [shape = 'f32[8,8,512]{2,1,0:T(8,128)}', space=vmem, size = 0x20000, scoped, tag = 'scratch operand']
  %s0 = inlined_call_operand.vmem [shape: s32[8,1], index: 0, kind: input, shape index: {}]
  %s1 = inlined_call_operand.vmem [shape: bf16[64,128], index: 1, kind: input, shape index: {}]
  %s2 = inlined_call_operand.vmem [shape: bf16[128,512], index: 2, kind: input, shape index: {}]
  %s3 = inlined_call_operand.vmem [shape: f32[128,512], index: 3, kind: input, shape index: {}]
  %s4 = inlined_call_operand.vmem [shape: f32[1,512], index: 4, kind: input, shape index: {}]
  %s5 = inlined_call_operand.vmem [shape: bf16[128,512], index: 5, kind: input, shape index: {}]
  %s6 = inlined_call_operand.vmem [shape: f32[128,512], index: 6, kind: input, shape index: {}]
  %s7 = inlined_call_operand.vmem [shape: f32[1,512], index: 7, kind: input, shape index: {}]
  %s8 = inlined_call_operand.vmem [shape: f32[128,128], index: 8, kind: input, shape index: {}]
  %s9 = inlined_call_operand.hbm [shape: f32[128,128], index: 9, kind: input, shape index: {}]
  %s10 = inlined_call_operand.vmem [shape: f32[1,128], index: 10, kind: input, shape index: {}]
  %s11 = inlined_call_operand.vmem [shape: f32[8,8], index: 11, kind: input, shape index: {}]
  %s12 = inlined_call_operand.vmem [shape: f32[8,8,128], index: 12, kind: output, shape index: {0}]
  %s13 = inlined_call_operand.vmem [shape: f32[8,1], index: 13, kind: output, shape index: {1}]
  %14 = xla_tuple %s12, %s13
  %s15 = sld [smem:[#allocation0]]
  $region84: #{bilstm_crf_loss.1} parent=0
    _
  %s17 = ssub.s32 1, %s15
  %s18 = scalar_select 0, %s17, %s15
  $region1: #{bilstm_crf_loss.1} parent=0
    #allocation4 [shape = 'u8[65536]{0}', space=vmem, size = 0x10000, scoped, tag = 'input window, operand 9, single buffered']
    #allocation5 [shape = 's32[1]{0}', space=sflag, size = 0x4, scoped, tag = 'scoped memory for bilstm_crf_loss.1']
    %19 = vsyncpa [#allocation5], 0
    // Predicated region
    $region2: #{bilstm_crf_loss.1} parent=1 // pred_check
      _
    $region3: #{bilstm_crf_loss.1} parent=1 // pred_check_branch
      %21 = sbr.rel (0) target = $region5
    $region4: #{bilstm_crf_loss.1} parent=1 // pred_region
      _
    $region5: #{bilstm_crf_loss.1} parent=1 // pred_fallthru
      _
    // Predicated region
    $region6: #{bilstm_crf_loss.1} parent=1 // pred_check
      _
    $region7: #{bilstm_crf_loss.1} parent=1 // pred_check_branch
      %23 = sbr.rel (0) target = $region9
    $region8: #{bilstm_crf_loss.1} parent=1 // pred_region
      _
    $region9: #{bilstm_crf_loss.1} parent=1 // pred_fallthru
      _
    // Predicated region
    $region10: #{bilstm_crf_loss.1} parent=1 // pred_check
      _
    $region11: #{bilstm_crf_loss.1} parent=1 // pred_check_branch
      %25 = sbr.rel (0) target = $region13
    $region12: #{bilstm_crf_loss.1} parent=1 // pred_region
      _
    $region13: #{bilstm_crf_loss.1} parent=1 // pred_fallthru
      _
    // Predicated region
    $region14: #{bilstm_crf_loss.1} parent=1 // pred_check
      _
    $region15: #{bilstm_crf_loss.1} parent=1 // pred_check_branch
      %27 = sbr.rel (0) target = $region17
    $region16: #{bilstm_crf_loss.1} parent=1 // pred_region
      _
    $region17: #{bilstm_crf_loss.1} parent=1 // pred_fallthru
      _
    // Predicated region
    $region18: #{bilstm_crf_loss.1} parent=1 // pred_check
      _
    $region19: #{bilstm_crf_loss.1} parent=1 // pred_check_branch
      %29 = sbr.rel (0) target = $region21
    $region20: #{bilstm_crf_loss.1} parent=1 // pred_region
      _
    $region21: #{bilstm_crf_loss.1} parent=1 // pred_fallthru
      _
    // Predicated region
    $region22: #{bilstm_crf_loss.1} parent=1 // pred_check
      _
    $region23: #{bilstm_crf_loss.1} parent=1 // pred_check_branch
      %31 = sbr.rel (0) target = $region25
    $region24: #{bilstm_crf_loss.1} parent=1 // pred_region
      _
    $region25: #{bilstm_crf_loss.1} parent=1 // pred_fallthru
      _
    // Predicated region
    $region26: #{bilstm_crf_loss.1} parent=1 // pred_check
      _
    $region27: #{bilstm_crf_loss.1} parent=1 // pred_check_branch
      %33 = sbr.rel (0) target = $region29
    $region28: #{bilstm_crf_loss.1} parent=1 // pred_region
      _
    $region29: #{bilstm_crf_loss.1} parent=1 // pred_fallthru
      _
    // Predicated region
    $region30: #{bilstm_crf_loss.1} parent=1 // pred_check
      _
    $region31: #{bilstm_crf_loss.1} parent=1 // pred_check_branch
      %35 = sbr.rel (0) target = $region33
    $region32: #{bilstm_crf_loss.1} parent=1 // pred_region
      _
    $region33: #{bilstm_crf_loss.1} parent=1 // pred_fallthru
      _
    // Predicated region
    $region34: #{bilstm_crf_loss.1} parent=1 // pred_check
      _
    $region35: #{bilstm_crf_loss.1} parent=1 // pred_check_branch
      %37 = sbr.rel (0) target = $region37
    $region36: #{bilstm_crf_loss.1} parent=1 // pred_region
      _
    $region37: #{bilstm_crf_loss.1} parent=1 // pred_fallthru
      _
    // Predicated region
    $region38: #{bilstm_crf_loss.1} parent=1 // pred_check
      _
    $region39: #{bilstm_crf_loss.1} parent=1 // pred_check_branch
      %39 = sbr.rel (0) target = $region41
    $region40: #{bilstm_crf_loss.1} parent=1 // pred_region
      %s41 = ssub.s32 2048, 2048
      %42 = vsyncadd [#allocation5], %s41
      %s43 = sshll.u32 [#allocation4], 4
      %s44 = int_to_ptr.vmem [resolvable:$true] %s43
      %49 = dma.hbm_to_vmem [thread:$0]  %s9, 2048, %s44, [#allocation5], 128, 128, 8
    $region41: #{bilstm_crf_loss.1} parent=1 // pred_fallthru
      _
    // Predicated region
    $region42: #{bilstm_crf_loss.1} parent=1 // pred_check
      _
    $region43: #{bilstm_crf_loss.1} parent=1 // pred_check_branch
      %51 = sbr.rel (0) target = $region45
    $region44: #{bilstm_crf_loss.1} parent=1 // pred_region
      _
    $region45: #{bilstm_crf_loss.1} parent=1 // pred_fallthru
      _
    // Predicated region
    $region46: #{bilstm_crf_loss.1} parent=1 // pred_check
      _
    $region47: #{bilstm_crf_loss.1} parent=1 // pred_check_branch
      %53 = sbr.rel (0) target = $region49
    $region48: #{bilstm_crf_loss.1} parent=1 // pred_region
      _
    $region49: #{bilstm_crf_loss.1} parent=1 // pred_fallthru
      _
    // Predicated region
    $region50: #{bilstm_crf_loss.1} parent=1 // pred_check
      _
    $region51: #{bilstm_crf_loss.1} parent=1 // pred_check_branch
      %55 = sbr.rel (0) target = $region53
    $region52: #{bilstm_crf_loss.1} parent=1 // pred_region
      %56 = dma.done [#allocation5], 2048
    $region53: #{bilstm_crf_loss.1} parent=1 // pred_fallthru
      _
    %v58 = vld [vmem:[%s0] sm:$0xff]
    %v59 = vld [vmem:[%s1] sm:$0xf]
    %v60 = vld [vmem:[%s1 + $0x4] sm:$0xf]
    %v61 = vld [vmem:[%s1 + $0x8] sm:$0xf]
    %v62 = vld [vmem:[%s1 + $0xc] sm:$0xf]
    %v63 = vld [vmem:[%s1 + $0x10] sm:$0xf]
    %v64 = vld [vmem:[%s1 + $0x14] sm:$0xf]
    %v65 = vld [vmem:[%s1 + $0x18] sm:$0xf]
    %v66 = vld [vmem:[%s1 + $0x1c] sm:$0xf]
    %v67 = vld [vmem:[%s2] sm:$0xff]
    %v68 = vld [vmem:[%s2 + $0x8] sm:$0xff]
    %v69 = vld [vmem:[%s2 + $0x10] sm:$0xff]
    %v70 = vld [vmem:[%s2 + $0x18] sm:$0xff]
    %v71 = vld [vmem:[%s2 + $0x20] sm:$0xff]
    %v72 = vld [vmem:[%s2 + $0x28] sm:$0xff]
    %v73 = vld [vmem:[%s2 + $0x30] sm:$0xff]
    %v74 = vld [vmem:[%s2 + $0x38] sm:$0xff]
    %v75 = vld [vmem:[%s2 + $0x40] sm:$0xff]
    %v76 = vld [vmem:[%s2 + $0x48] sm:$0xff]
    %v77 = vld [vmem:[%s2 + $0x50] sm:$0xff]
    %v78 = vld [vmem:[%s2 + $0x58] sm:$0xff]
    %v79 = vld [vmem:[%s2 + $0x60] sm:$0xff]
    %v80 = vld [vmem:[%s2 + $0x68] sm:$0xff]
    %v81 = vld [vmem:[%s2 + $0x70] sm:$0xff]
    %v82 = vld [vmem:[%s2 + $0x78] sm:$0xff]
    %v83 = vld [vmem:[%s2 + $0x80] sm:$0xff]
    %v84 = vld [vmem:[%s2 + $0x88] sm:$0xff]
    %v85 = vld [vmem:[%s2 + $0x90] sm:$0xff]
    %v86 = vld [vmem:[%s2 + $0x98] sm:$0xff]
    %v87 = vld [vmem:[%s2 + $0xa0] sm:$0xff]
    %v88 = vld [vmem:[%s2 + $0xa8] sm:$0xff]
    %v89 = vld [vmem:[%s2 + $0xb0] sm:$0xff]
    %v90 = vld [vmem:[%s2 + $0xb8] sm:$0xff]
    %v91 = vld [vmem:[%s2 + $0xc0] sm:$0xff]
    %v92 = vld [vmem:[%s2 + $0xc8] sm:$0xff]
    %v93 = vld [vmem:[%s2 + $0xd0] sm:$0xff]
    %v94 = vld [vmem:[%s2 + $0xd8] sm:$0xff]
    %v95 = vld [vmem:[%s2 + $0xe0] sm:$0xff]
    %v96 = vld [vmem:[%s2 + $0xe8] sm:$0xff]
    %v97 = vld [vmem:[%s2 + $0xf0] sm:$0xff]
    %v98 = vld [vmem:[%s2 + $0xf8] sm:$0xff]
    %v99 = vld [vmem:[%s4] sm:$0xf]
    %v101 = vlaneseq
    %v102 = vshrl.u32 %v101, 7
    %v103 = vsub.s32 0, %v102
    %v104 = vrot.slane %v99, %v103
    %v105 = vlaneseq
    %v106 = vshrl.u32 %v105, 7
    %v107 = vsub.s32 1, %v106
    %v108 = vrot.slane %v99, %v107
    %v109 = vlaneseq
    %v110 = vshrl.u32 %v109, 7
    %v111 = vsub.s32 2, %v110
    %v112 = vrot.slane %v99, %v111
    %v113 = vlaneseq
    %v114 = vshrl.u32 %v113, 7
    %v115 = vsub.s32 3, %v114
    %v116 = vrot.slane %v99, %v115
    %v129 = vunpack.c.l.b16 %v59
    %v130 = vunpack.c.l.b16 %v60
    %v131 = vunpack.c.l.b16 %v61
    %v132 = vunpack.c.l.b16 %v62
    %v133 = vunpack.c.l.b16 %v63
    %v134 = vunpack.c.l.b16 %v64
    %v135 = vunpack.c.l.b16 %v65
    %v136 = vunpack.c.l.b16 %v66
    %v137 = vpack.c.b16 %v130, %v129
    %v138 = vpack.c.b16 %v132, %v131
    %v139 = vpack.c.b16 %v134, %v133
    %v140 = vpack.c.b16 %v136, %v135
    %v177 = vunpack.c.l.b16 %v67
    %v178 = vunpack.c.h.b16 %v67
    %v179 = vunpack.c.l.b16 %v68
    %v180 = vunpack.c.h.b16 %v68
    %v181 = vunpack.c.l.b16 %v69
    %v182 = vunpack.c.h.b16 %v69
    %v183 = vunpack.c.l.b16 %v70
    %v184 = vunpack.c.h.b16 %v70
    %v185 = vunpack.c.l.b16 %v71
    %v186 = vunpack.c.h.b16 %v71
    %v187 = vunpack.c.l.b16 %v72
    %v188 = vunpack.c.h.b16 %v72
    %v189 = vunpack.c.l.b16 %v73
    %v190 = vunpack.c.h.b16 %v73
    %v191 = vunpack.c.l.b16 %v74
    %v192 = vunpack.c.h.b16 %v74
    %v193 = vunpack.c.l.b16 %v75
    %v194 = vunpack.c.h.b16 %v75
    %v195 = vunpack.c.l.b16 %v76
    %v196 = vunpack.c.h.b16 %v76
    %v197 = vunpack.c.l.b16 %v77
    %v198 = vunpack.c.h.b16 %v77
    %v199 = vunpack.c.l.b16 %v78
    %v200 = vunpack.c.h.b16 %v78
    %v201 = vunpack.c.l.b16 %v79
    %v202 = vunpack.c.h.b16 %v79
    %v203 = vunpack.c.l.b16 %v80
    %v204 = vunpack.c.h.b16 %v80
    %v205 = vunpack.c.l.b16 %v81
    %v206 = vunpack.c.h.b16 %v81
    %v207 = vunpack.c.l.b16 %v82
    %v208 = vunpack.c.h.b16 %v82
    %v209 = vunpack.c.l.b16 %v83
    %v210 = vunpack.c.h.b16 %v83
    %v211 = vunpack.c.l.b16 %v84
    %v212 = vunpack.c.h.b16 %v84
    %v213 = vunpack.c.l.b16 %v85
    %v214 = vunpack.c.h.b16 %v85
    %v215 = vunpack.c.l.b16 %v86
    %v216 = vunpack.c.h.b16 %v86
    %v217 = vunpack.c.l.b16 %v87
    %v218 = vunpack.c.h.b16 %v87
    %v219 = vunpack.c.l.b16 %v88
    %v220 = vunpack.c.h.b16 %v88
    %v221 = vunpack.c.l.b16 %v89
    %v222 = vunpack.c.h.b16 %v89
    %v223 = vunpack.c.l.b16 %v90
    %v224 = vunpack.c.h.b16 %v90
    %v225 = vunpack.c.l.b16 %v91
    %v226 = vunpack.c.h.b16 %v91
    %v227 = vunpack.c.l.b16 %v92
    %v228 = vunpack.c.h.b16 %v92
    %v229 = vunpack.c.l.b16 %v93
    %v230 = vunpack.c.h.b16 %v93
    %v231 = vunpack.c.l.b16 %v94
    %v232 = vunpack.c.h.b16 %v94
    %v233 = vunpack.c.l.b16 %v95
    %v234 = vunpack.c.h.b16 %v95
    %v235 = vunpack.c.l.b16 %v96
    %v236 = vunpack.c.h.b16 %v96
    %v237 = vunpack.c.l.b16 %v97
    %v238 = vunpack.c.h.b16 %v97
    %v239 = vunpack.c.l.b16 %v98
    %v240 = vunpack.c.h.b16 %v98
    %v241 = vpack.c.b16 %v181, %v177
    %v242 = vpack.c.b16 %v182, %v178
    %v243 = vpack.c.b16 %v183, %v179
    %v244 = vpack.c.b16 %v184, %v180
    %v245 = vpack.c.b16 %v189, %v185
    %v246 = vpack.c.b16 %v190, %v186
    %v247 = vpack.c.b16 %v191, %v187
    %v248 = vpack.c.b16 %v192, %v188
    %v249 = vpack.c.b16 %v197, %v193
    %v250 = vpack.c.b16 %v198, %v194
    %v251 = vpack.c.b16 %v199, %v195
    %v252 = vpack.c.b16 %v200, %v196
    %v253 = vpack.c.b16 %v205, %v201
    %v254 = vpack.c.b16 %v206, %v202
    %v255 = vpack.c.b16 %v207, %v203
    %v256 = vpack.c.b16 %v208, %v204
    %v257 = vpack.c.b16 %v213, %v209
    %v258 = vpack.c.b16 %v214, %v210
    %v259 = vpack.c.b16 %v215, %v211
    %v260 = vpack.c.b16 %v216, %v212
    %v261 = vpack.c.b16 %v221, %v217
    %v262 = vpack.c.b16 %v222, %v218
    %v263 = vpack.c.b16 %v223, %v219
    %v264 = vpack.c.b16 %v224, %v220
    %v265 = vpack.c.b16 %v229, %v225
    %v266 = vpack.c.b16 %v230, %v226
    %v267 = vpack.c.b16 %v231, %v227
    %v268 = vpack.c.b16 %v232, %v228
    %v269 = vpack.c.b16 %v237, %v233
    %v270 = vpack.c.b16 %v238, %v234
    %v271 = vpack.c.b16 %v239, %v235
    %v272 = vpack.c.b16 %v240, %v236
    %305 = vmatprep.subr.bf16.mxu0 %v270
    %306 = vmatpush1.bf16.msra.mxu0 %v269
    %307 = vmatprep.subr.bf16.mxu0 %v266
    %308 = vmatpush1.bf16.msra.mxu0 %v265
    %309 = vmatprep.subr.bf16.mxu0 %v262
    %310 = vmatpush1.bf16.msra.mxu0 %v261
    %311 = vmatprep.subr.bf16.mxu0 %v258
    %312 = vmatpush1.bf16.msra.mxu0 %v257
    %313 = vmatprep.subr.bf16.mxu0 %v254
    %314 = vmatpush1.bf16.msra.mxu0 %v253
    %315 = vmatprep.subr.bf16.mxu0 %v250
    %316 = vmatpush1.bf16.msra.mxu0 %v249
    %317 = vmatprep.subr.bf16.mxu0 %v246
    %318 = vmatpush1.bf16.msra.mxu0 %v245
    %319 = vmatprep.subr.bf16.mxu0 %v242
    %320 = vmatpush1.bf16.msra.mxu0 %v241
    %321 = vmatprep.subr.bf16.mxu0 0
    %322 = vmatpush2.bf16.msra.mxu0 0
    %323 = vmatprep.subr.bf16.mxu0 0
    %324 = vmatpush2.bf16.msra.mxu0 0
    %325 = vmatprep.subr.bf16.mxu0 0
    %326 = vmatpush2.bf16.msra.mxu0 0
    %327 = vmatprep.subr.bf16.mxu0 0
    %328 = vmatpush2.bf16.msra.mxu0 0
    %329 = vmatprep.subr.bf16.mxu0 0
    %330 = vmatpush2.bf16.msra.mxu0 0
    %331 = vmatprep.subr.bf16.mxu0 0
    %332 = vmatpush2.bf16.msra.mxu0 0
    %333 = vmatprep.subr.bf16.mxu0 0
    %334 = vmatpush2.bf16.msra.mxu0 0
    %335 = vmatprep.subr.bf16.mxu0 0
    %336 = vmatpush2.bf16.msra.mxu0 0
    %337 = vmatprep.mubr.bf16.mxu0 0
    %338 = vmatmul.mubr.bf16.gmra.mxu0 %v137
    %v339 = vpop.f32.mrf.mxu0
    %v340 = vadd.f32 %v104, %v339
    %v341 = vpop.f32.mrf.mxu0
    %v342 = vadd.f32 %v108, %v341
    %v343 = vpop.f32.mrf.mxu0
    %v344 = vadd.f32 %v104, %v343
    %v345 = vpop.f32.mrf.mxu0
    %v346 = vadd.f32 %v108, %v345
    %347 = vmatprep.mubr.bf16.mxu0 0
    %348 = vmatmul.mubr.bf16.gmra.mxu0 %v138
    %v349 = vpop.f32.mrf.mxu0
    %v350 = vadd.f32 %v104, %v349
    %v351 = vpop.f32.mrf.mxu0
    %v352 = vadd.f32 %v108, %v351
    %v353 = vpop.f32.mrf.mxu0
    %v354 = vadd.f32 %v104, %v353
    %v355 = vpop.f32.mrf.mxu0
    %v356 = vadd.f32 %v108, %v355
    %357 = vmatprep.mubr.bf16.mxu0 0
    %358 = vmatmul.mubr.bf16.gmra.mxu0 %v139
    %v359 = vpop.f32.mrf.mxu0
    %v360 = vadd.f32 %v104, %v359
    %v361 = vpop.f32.mrf.mxu0
    %v362 = vadd.f32 %v108, %v361
    %v363 = vpop.f32.mrf.mxu0
    %v364 = vadd.f32 %v104, %v363
    %v365 = vpop.f32.mrf.mxu0
    %v366 = vadd.f32 %v108, %v365
    %367 = vmatprep.mubr.bf16.mxu0 0
    %368 = vmatmul.mubr.bf16.gmra.mxu0 %v140
    %v369 = vpop.f32.mrf.mxu0
    %v370 = vadd.f32 %v104, %v369
    %v371 = vpop.f32.mrf.mxu0
    %v372 = vadd.f32 %v108, %v371
    %v373 = vpop.f32.mrf.mxu0
    %v374 = vadd.f32 %v104, %v373
    %v375 = vpop.f32.mrf.mxu0
    %v376 = vadd.f32 %v108, %v375
    %377 = vdwg.mxu0
    %378 = vmatprep.subr.bf16.mxu0 %v272
    %379 = vmatpush1.bf16.msra.mxu0 %v271
    %380 = vmatprep.subr.bf16.mxu0 %v268
    %381 = vmatpush1.bf16.msra.mxu0 %v267
    %382 = vmatprep.subr.bf16.mxu0 %v264
    %383 = vmatpush1.bf16.msra.mxu0 %v263
    %384 = vmatprep.subr.bf16.mxu0 %v260
    %385 = vmatpush1.bf16.msra.mxu0 %v259
    %386 = vmatprep.subr.bf16.mxu0 %v256
    %387 = vmatpush1.bf16.msra.mxu0 %v255
    %388 = vmatprep.subr.bf16.mxu0 %v252
    %389 = vmatpush1.bf16.msra.mxu0 %v251
    %390 = vmatprep.subr.bf16.mxu0 %v248
    %391 = vmatpush1.bf16.msra.mxu0 %v247
    %392 = vmatprep.subr.bf16.mxu0 %v244
    %393 = vmatpush1.bf16.msra.mxu0 %v243
    %394 = vmatprep.subr.bf16.mxu0 0
    %395 = vmatpush2.bf16.msra.mxu0 0
    %396 = vmatprep.subr.bf16.mxu0 0
    %397 = vmatpush2.bf16.msra.mxu0 0
    %398 = vmatprep.subr.bf16.mxu0 0
    %399 = vmatpush2.bf16.msra.mxu0 0
    %400 = vmatprep.subr.bf16.mxu0 0
    %401 = vmatpush2.bf16.msra.mxu0 0
    %402 = vmatprep.subr.bf16.mxu0 0
    %403 = vmatpush2.bf16.msra.mxu0 0
    %404 = vmatprep.subr.bf16.mxu0 0
    %405 = vmatpush2.bf16.msra.mxu0 0
    %406 = vmatprep.subr.bf16.mxu0 0
    %407 = vmatpush2.bf16.msra.mxu0 0
    %408 = vmatprep.subr.bf16.mxu0 0
    %409 = vmatpush2.bf16.msra.mxu0 0
    %410 = vmatprep.mubr.bf16.mxu0 0
    %411 = vmatmul.mubr.bf16.gmra.mxu0 %v137
    %v412 = vpop.f32.mrf.mxu0
    %v413 = vadd.f32 %v112, %v412
    %v414 = vpop.f32.mrf.mxu0
    %v415 = vadd.f32 %v116, %v414
    %v416 = vpop.f32.mrf.mxu0
    %v417 = vadd.f32 %v112, %v416
    %v418 = vpop.f32.mrf.mxu0
    %v419 = vadd.f32 %v116, %v418
    %420 = vmatprep.mubr.bf16.mxu0 0
    %421 = vmatmul.mubr.bf16.gmra.mxu0 %v138
    %v422 = vpop.f32.mrf.mxu0
    %v423 = vadd.f32 %v112, %v422
    %v424 = vpop.f32.mrf.mxu0
    %v425 = vadd.f32 %v116, %v424
    %v426 = vpop.f32.mrf.mxu0
    %v427 = vadd.f32 %v112, %v426
    %v428 = vpop.f32.mrf.mxu0
    %v429 = vadd.f32 %v116, %v428
    %430 = vmatprep.mubr.bf16.mxu0 0
    %431 = vmatmul.mubr.bf16.gmra.mxu0 %v139
    %v432 = vpop.f32.mrf.mxu0
    %v433 = vadd.f32 %v112, %v432
    %v434 = vpop.f32.mrf.mxu0
    %v435 = vadd.f32 %v116, %v434
    %v436 = vpop.f32.mrf.mxu0
    %v437 = vadd.f32 %v112, %v436
    %v438 = vpop.f32.mrf.mxu0
    %v439 = vadd.f32 %v116, %v438
    %440 = vmatprep.mubr.bf16.mxu0 0
    %441 = vmatmul.mubr.bf16.gmra.mxu0 %v140
    %v442 = vpop.f32.mrf.mxu0
    %v443 = vadd.f32 %v112, %v442
    %v444 = vpop.f32.mrf.mxu0
    %v445 = vadd.f32 %v116, %v444
    %v446 = vpop.f32.mrf.mxu0
    %v447 = vadd.f32 %v112, %v446
    %v448 = vpop.f32.mrf.mxu0
    %v449 = vadd.f32 %v116, %v448
    %450 = vdwg.mxu0
    %451 = vst [vmem:[#allocation2] sm:$0xff] %v340
    %452 = vst [vmem:[#allocation2 + $0x8] sm:$0xff] %v342
    %453 = vst [vmem:[#allocation2 + $0x10] sm:$0xff] %v413
    %454 = vst [vmem:[#allocation2 + $0x18] sm:$0xff] %v415
    %455 = vst [vmem:[#allocation2 + $0x20] sm:$0xff] %v344
    %456 = vst [vmem:[#allocation2 + $0x28] sm:$0xff] %v346
    %457 = vst [vmem:[#allocation2 + $0x30] sm:$0xff] %v417
    %458 = vst [vmem:[#allocation2 + $0x38] sm:$0xff] %v419
    %459 = vst [vmem:[#allocation2 + $0x40] sm:$0xff] %v350
    %460 = vst [vmem:[#allocation2 + $0x48] sm:$0xff] %v352
    %461 = vst [vmem:[#allocation2 + $0x50] sm:$0xff] %v423
    %462 = vst [vmem:[#allocation2 + $0x58] sm:$0xff] %v425
    %463 = vst [vmem:[#allocation2 + $0x60] sm:$0xff] %v354
    %464 = vst [vmem:[#allocation2 + $0x68] sm:$0xff] %v356
    %465 = vst [vmem:[#allocation2 + $0x70] sm:$0xff] %v427
    %466 = vst [vmem:[#allocation2 + $0x78] sm:$0xff] %v429
    %467 = vst [vmem:[#allocation2 + $0x80] sm:$0xff] %v360
    %468 = vst [vmem:[#allocation2 + $0x88] sm:$0xff] %v362
    %469 = vst [vmem:[#allocation2 + $0x90] sm:$0xff] %v433
    %470 = vst [vmem:[#allocation2 + $0x98] sm:$0xff] %v435
    %471 = vst [vmem:[#allocation2 + $0xa0] sm:$0xff] %v364
    %472 = vst [vmem:[#allocation2 + $0xa8] sm:$0xff] %v366
    %473 = vst [vmem:[#allocation2 + $0xb0] sm:$0xff] %v437
    %474 = vst [vmem:[#allocation2 + $0xb8] sm:$0xff] %v439
    %475 = vst [vmem:[#allocation2 + $0xc0] sm:$0xff] %v370
    %476 = vst [vmem:[#allocation2 + $0xc8] sm:$0xff] %v372
    %477 = vst [vmem:[#allocation2 + $0xd0] sm:$0xff] %v443
    %478 = vst [vmem:[#allocation2 + $0xd8] sm:$0xff] %v445
    %479 = vst [vmem:[#allocation2 + $0xe0] sm:$0xff] %v374
    %480 = vst [vmem:[#allocation2 + $0xe8] sm:$0xff] %v376
    %481 = vst [vmem:[#allocation2 + $0xf0] sm:$0xff] %v447
    %482 = vst [vmem:[#allocation2 + $0xf8] sm:$0xff] %v449
    %v483 = vld [vmem:[%s5] sm:$0xff]
    %v484 = vld [vmem:[%s5 + $0x8] sm:$0xff]
    %v485 = vld [vmem:[%s5 + $0x10] sm:$0xff]
    %v486 = vld [vmem:[%s5 + $0x18] sm:$0xff]
    %v487 = vld [vmem:[%s5 + $0x20] sm:$0xff]
    %v488 = vld [vmem:[%s5 + $0x28] sm:$0xff]
    %v489 = vld [vmem:[%s5 + $0x30] sm:$0xff]
    %v490 = vld [vmem:[%s5 + $0x38] sm:$0xff]
    %v491 = vld [vmem:[%s5 + $0x40] sm:$0xff]
    %v492 = vld [vmem:[%s5 + $0x48] sm:$0xff]
    %v493 = vld [vmem:[%s5 + $0x50] sm:$0xff]
    %v494 = vld [vmem:[%s5 + $0x58] sm:$0xff]
    %v495 = vld [vmem:[%s5 + $0x60] sm:$0xff]
    %v496 = vld [vmem:[%s5 + $0x68] sm:$0xff]
    %v497 = vld [vmem:[%s5 + $0x70] sm:$0xff]
    %v498 = vld [vmem:[%s5 + $0x78] sm:$0xff]
    %v499 = vld [vmem:[%s5 + $0x80] sm:$0xff]
    %v500 = vld [vmem:[%s5 + $0x88] sm:$0xff]
    %v501 = vld [vmem:[%s5 + $0x90] sm:$0xff]
    %v502 = vld [vmem:[%s5 + $0x98] sm:$0xff]
    %v503 = vld [vmem:[%s5 + $0xa0] sm:$0xff]
    %v504 = vld [vmem:[%s5 + $0xa8] sm:$0xff]
    %v505 = vld [vmem:[%s5 + $0xb0] sm:$0xff]
    %v506 = vld [vmem:[%s5 + $0xb8] sm:$0xff]
    %v507 = vld [vmem:[%s5 + $0xc0] sm:$0xff]
    %v508 = vld [vmem:[%s5 + $0xc8] sm:$0xff]
    %v509 = vld [vmem:[%s5 + $0xd0] sm:$0xff]
    %v510 = vld [vmem:[%s5 + $0xd8] sm:$0xff]
    %v511 = vld [vmem:[%s5 + $0xe0] sm:$0xff]
    %v512 = vld [vmem:[%s5 + $0xe8] sm:$0xff]
    %v513 = vld [vmem:[%s5 + $0xf0] sm:$0xff]
    %v514 = vld [vmem:[%s5 + $0xf8] sm:$0xff]
    %v515 = vld [vmem:[%s7] sm:$0xf]
    %v517 = vlaneseq
    %v518 = vshrl.u32 %v517, 7
    %v519 = vsub.s32 0, %v518
    %v520 = vrot.slane %v515, %v519
    %v521 = vlaneseq
    %v522 = vshrl.u32 %v521, 7
    %v523 = vsub.s32 1, %v522
    %v524 = vrot.slane %v515, %v523
    %v525 = vlaneseq
    %v526 = vshrl.u32 %v525, 7
    %v527 = vsub.s32 2, %v526
    %v528 = vrot.slane %v515, %v527
    %v529 = vlaneseq
    %v530 = vshrl.u32 %v529, 7
    %v531 = vsub.s32 3, %v530
    %v532 = vrot.slane %v515, %v531
    %v569 = vunpack.c.l.b16 %v483
    %v570 = vunpack.c.h.b16 %v483
    %v571 = vunpack.c.l.b16 %v484
    %v572 = vunpack.c.h.b16 %v484
    %v573 = vunpack.c.l.b16 %v485
    %v574 = vunpack.c.h.b16 %v485
    %v575 = vunpack.c.l.b16 %v486
    %v576 = vunpack.c.h.b16 %v486
    %v577 = vunpack.c.l.b16 %v487
    %v578 = vunpack.c.h.b16 %v487
    %v579 = vunpack.c.l.b16 %v488
    %v580 = vunpack.c.h.b16 %v488
    %v581 = vunpack.c.l.b16 %v489
    %v582 = vunpack.c.h.b16 %v489
    %v583 = vunpack.c.l.b16 %v490
    %v584 = vunpack.c.h.b16 %v490
    %v585 = vunpack.c.l.b16 %v491
    %v586 = vunpack.c.h.b16 %v491
    %v587 = vunpack.c.l.b16 %v492
    %v588 = vunpack.c.h.b16 %v492
    %v589 = vunpack.c.l.b16 %v493
    %v590 = vunpack.c.h.b16 %v493
    %v591 = vunpack.c.l.b16 %v494
    %v592 = vunpack.c.h.b16 %v494
    %v593 = vunpack.c.l.b16 %v495
    %v594 = vunpack.c.h.b16 %v495
    %v595 = vunpack.c.l.b16 %v496
    %v596 = vunpack.c.h.b16 %v496
    %v597 = vunpack.c.l.b16 %v497
    %v598 = vunpack.c.h.b16 %v497
    %v599 = vunpack.c.l.b16 %v498
    %v600 = vunpack.c.h.b16 %v498
    %v601 = vunpack.c.l.b16 %v499
    %v602 = vunpack.c.h.b16 %v499
    %v603 = vunpack.c.l.b16 %v500
    %v604 = vunpack.c.h.b16 %v500
    %v605 = vunpack.c.l.b16 %v501
    %v606 = vunpack.c.h.b16 %v501
    %v607 = vunpack.c.l.b16 %v502
    %v608 = vunpack.c.h.b16 %v502
    %v609 = vunpack.c.l.b16 %v503
    %v610 = vunpack.c.h.b16 %v503
    %v611 = vunpack.c.l.b16 %v504
    %v612 = vunpack.c.h.b16 %v504
    %v613 = vunpack.c.l.b16 %v505
    %v614 = vunpack.c.h.b16 %v505
    %v615 = vunpack.c.l.b16 %v506
    %v616 = vunpack.c.h.b16 %v506
    %v617 = vunpack.c.l.b16 %v507
    %v618 = vunpack.c.h.b16 %v507
    %v619 = vunpack.c.l.b16 %v508
    %v620 = vunpack.c.h.b16 %v508
    %v621 = vunpack.c.l.b16 %v509
    %v622 = vunpack.c.h.b16 %v509
    %v623 = vunpack.c.l.b16 %v510
    %v624 = vunpack.c.h.b16 %v510
    %v625 = vunpack.c.l.b16 %v511
    %v626 = vunpack.c.h.b16 %v511
    %v627 = vunpack.c.l.b16 %v512
    %v628 = vunpack.c.h.b16 %v512
    %v629 = vunpack.c.l.b16 %v513
    %v630 = vunpack.c.h.b16 %v513
    %v631 = vunpack.c.l.b16 %v514
    %v632 = vunpack.c.h.b16 %v514
    %v633 = vpack.c.b16 %v573, %v569
    %v634 = vpack.c.b16 %v574, %v570
    %v635 = vpack.c.b16 %v575, %v571
    %v636 = vpack.c.b16 %v576, %v572
    %v637 = vpack.c.b16 %v581, %v577
    %v638 = vpack.c.b16 %v582, %v578
    %v639 = vpack.c.b16 %v583, %v579
    %v640 = vpack.c.b16 %v584, %v580
    %v641 = vpack.c.b16 %v589, %v585
    %v642 = vpack.c.b16 %v590, %v586
    %v643 = vpack.c.b16 %v591, %v587
    %v644 = vpack.c.b16 %v592, %v588
    %v645 = vpack.c.b16 %v597, %v593
    %v646 = vpack.c.b16 %v598, %v594
    %v647 = vpack.c.b16 %v599, %v595
    %v648 = vpack.c.b16 %v600, %v596
    %v649 = vpack.c.b16 %v605, %v601
    %v650 = vpack.c.b16 %v606, %v602
    %v651 = vpack.c.b16 %v607, %v603
    %v652 = vpack.c.b16 %v608, %v604
    %v653 = vpack.c.b16 %v613, %v609
    %v654 = vpack.c.b16 %v614, %v610
    %v655 = vpack.c.b16 %v615, %v611
    %v656 = vpack.c.b16 %v616, %v612
    %v657 = vpack.c.b16 %v621, %v617
    %v658 = vpack.c.b16 %v622, %v618
    %v659 = vpack.c.b16 %v623, %v619
    %v660 = vpack.c.b16 %v624, %v620
    %v661 = vpack.c.b16 %v629, %v625
    %v662 = vpack.c.b16 %v630, %v626
    %v663 = vpack.c.b16 %v631, %v627
    %v664 = vpack.c.b16 %v632, %v628
    %697 = vmatprep.subr.bf16.mxu0 %v662
    %698 = vmatpush1.bf16.msra.mxu0 %v661
    %699 = vmatprep.subr.bf16.mxu0 %v658
    %700 = vmatpush1.bf16.msra.mxu0 %v657
    %701 = vmatprep.subr.bf16.mxu0 %v654
    %702 = vmatpush1.bf16.msra.mxu0 %v653
    %703 = vmatprep.subr.bf16.mxu0 %v650
    %704 = vmatpush1.bf16.msra.mxu0 %v649
    %705 = vmatprep.subr.bf16.mxu0 %v646
    %706 = vmatpush1.bf16.msra.mxu0 %v645
    %707 = vmatprep.subr.bf16.mxu0 %v642
    %708 = vmatpush1.bf16.msra.mxu0 %v641
    %709 = vmatprep.subr.bf16.mxu0 %v638
    %710 = vmatpush1.bf16.msra.mxu0 %v637
    %711 = vmatprep.subr.bf16.mxu0 %v634
    %712 = vmatpush1.bf16.msra.mxu0 %v633
    %713 = vmatprep.subr.bf16.mxu0 0
    %714 = vmatpush2.bf16.msra.mxu0 0
    %715 = vmatprep.subr.bf16.mxu0 0
    %716 = vmatpush2.bf16.msra.mxu0 0
    %717 = vmatprep.subr.bf16.mxu0 0
    %718 = vmatpush2.bf16.msra.mxu0 0
    %719 = vmatprep.subr.bf16.mxu0 0
    %720 = vmatpush2.bf16.msra.mxu0 0
    %721 = vmatprep.subr.bf16.mxu0 0
    %722 = vmatpush2.bf16.msra.mxu0 0
    %723 = vmatprep.subr.bf16.mxu0 0
    %724 = vmatpush2.bf16.msra.mxu0 0
    %725 = vmatprep.subr.bf16.mxu0 0
    %726 = vmatpush2.bf16.msra.mxu0 0
    %727 = vmatprep.subr.bf16.mxu0 0
    %728 = vmatpush2.bf16.msra.mxu0 0
    %729 = vmatprep.mubr.bf16.mxu0 0
    %730 = vmatmul.mubr.bf16.gmra.mxu0 %v137
    %v731 = vpop.f32.mrf.mxu0
    %v732 = vadd.f32 %v520, %v731
    %v733 = vpop.f32.mrf.mxu0
    %v734 = vadd.f32 %v524, %v733
    %v735 = vpop.f32.mrf.mxu0
    %v736 = vadd.f32 %v520, %v735
    %v737 = vpop.f32.mrf.mxu0
    %v738 = vadd.f32 %v524, %v737
    %739 = vmatprep.mubr.bf16.mxu0 0
    %740 = vmatmul.mubr.bf16.gmra.mxu0 %v138
    %v741 = vpop.f32.mrf.mxu0
    %v742 = vadd.f32 %v520, %v741
    %v743 = vpop.f32.mrf.mxu0
    %v744 = vadd.f32 %v524, %v743
    %v745 = vpop.f32.mrf.mxu0
    %v746 = vadd.f32 %v520, %v745
    %v747 = vpop.f32.mrf.mxu0
    %v748 = vadd.f32 %v524, %v747
    %749 = vmatprep.mubr.bf16.mxu0 0
    %750 = vmatmul.mubr.bf16.gmra.mxu0 %v139
    %v751 = vpop.f32.mrf.mxu0
    %v752 = vadd.f32 %v520, %v751
    %v753 = vpop.f32.mrf.mxu0
    %v754 = vadd.f32 %v524, %v753
    %v755 = vpop.f32.mrf.mxu0
    %v756 = vadd.f32 %v520, %v755
    %v757 = vpop.f32.mrf.mxu0
    %v758 = vadd.f32 %v524, %v757
    %759 = vmatprep.mubr.bf16.mxu0 0
    %760 = vmatmul.mubr.bf16.gmra.mxu0 %v140
    %v761 = vpop.f32.mrf.mxu0
    %v762 = vadd.f32 %v520, %v761
    %v763 = vpop.f32.mrf.mxu0
    %v764 = vadd.f32 %v524, %v763
    %v765 = vpop.f32.mrf.mxu0
    %v766 = vadd.f32 %v520, %v765
    %v767 = vpop.f32.mrf.mxu0
    %v768 = vadd.f32 %v524, %v767
    %769 = vdwg.mxu0
    %770 = vmatprep.subr.bf16.mxu0 %v664
    %771 = vmatpush1.bf16.msra.mxu0 %v663
    %772 = vmatprep.subr.bf16.mxu0 %v660
    %773 = vmatpush1.bf16.msra.mxu0 %v659
    %774 = vmatprep.subr.bf16.mxu0 %v656
    %775 = vmatpush1.bf16.msra.mxu0 %v655
    %776 = vmatprep.subr.bf16.mxu0 %v652
    %777 = vmatpush1.bf16.msra.mxu0 %v651
    %778 = vmatprep.subr.bf16.mxu0 %v648
    %779 = vmatpush1.bf16.msra.mxu0 %v647
    %780 = vmatprep.subr.bf16.mxu0 %v644
    %781 = vmatpush1.bf16.msra.mxu0 %v643
    %782 = vmatprep.subr.bf16.mxu0 %v640
    %783 = vmatpush1.bf16.msra.mxu0 %v639
    %784 = vmatprep.subr.bf16.mxu0 %v636
    %785 = vmatpush1.bf16.msra.mxu0 %v635
    %786 = vmatprep.subr.bf16.mxu0 0
    %787 = vmatpush2.bf16.msra.mxu0 0
    %788 = vmatprep.subr.bf16.mxu0 0
    %789 = vmatpush2.bf16.msra.mxu0 0
    %790 = vmatprep.subr.bf16.mxu0 0
    %791 = vmatpush2.bf16.msra.mxu0 0
    %792 = vmatprep.subr.bf16.mxu0 0
    %793 = vmatpush2.bf16.msra.mxu0 0
    %794 = vmatprep.subr.bf16.mxu0 0
    %795 = vmatpush2.bf16.msra.mxu0 0
    %796 = vmatprep.subr.bf16.mxu0 0
    %797 = vmatpush2.bf16.msra.mxu0 0
    %798 = vmatprep.subr.bf16.mxu0 0
    %799 = vmatpush2.bf16.msra.mxu0 0
    %800 = vmatprep.subr.bf16.mxu0 0
    %801 = vmatpush2.bf16.msra.mxu0 0
    %802 = vmatprep.mubr.bf16.mxu0 0
    %803 = vmatmul.mubr.bf16.gmra.mxu0 %v137
    %v804 = vpop.f32.mrf.mxu0
    %v805 = vadd.f32 %v528, %v804
    %v806 = vpop.f32.mrf.mxu0
    %v807 = vadd.f32 %v532, %v806
    %v808 = vpop.f32.mrf.mxu0
    %v809 = vadd.f32 %v528, %v808
    %v810 = vpop.f32.mrf.mxu0
    %v811 = vadd.f32 %v532, %v810
    %812 = vmatprep.mubr.bf16.mxu0 0
    %813 = vmatmul.mubr.bf16.gmra.mxu0 %v138
    %v814 = vpop.f32.mrf.mxu0
    %v815 = vadd.f32 %v528, %v814
    %v816 = vpop.f32.mrf.mxu0
    %v817 = vadd.f32 %v532, %v816
    %v818 = vpop.f32.mrf.mxu0
    %v819 = vadd.f32 %v528, %v818
    %v820 = vpop.f32.mrf.mxu0
    %v821 = vadd.f32 %v532, %v820
    %822 = vmatprep.mubr.bf16.mxu0 0
    %823 = vmatmul.mubr.bf16.gmra.mxu0 %v139
    %v824 = vpop.f32.mrf.mxu0
    %v825 = vadd.f32 %v528, %v824
    %v826 = vpop.f32.mrf.mxu0
    %v827 = vadd.f32 %v532, %v826
    %v828 = vpop.f32.mrf.mxu0
    %v829 = vadd.f32 %v528, %v828
    %v830 = vpop.f32.mrf.mxu0
    %v831 = vadd.f32 %v532, %v830
    %832 = vmatprep.mubr.bf16.mxu0 0
    %833 = vmatmul.mubr.bf16.gmra.mxu0 %v140
    %v834 = vpop.f32.mrf.mxu0
    %v835 = vadd.f32 %v528, %v834
    %v836 = vpop.f32.mrf.mxu0
    %v837 = vadd.f32 %v532, %v836
    %v838 = vpop.f32.mrf.mxu0
    %v839 = vadd.f32 %v528, %v838
    %v840 = vpop.f32.mrf.mxu0
    %v841 = vadd.f32 %v532, %v840
    %842 = vdwg.mxu0
    %843 = vst [vmem:[#allocation3] sm:$0xff] %v732
    %844 = vst [vmem:[#allocation3 + $0x8] sm:$0xff] %v734
    %845 = vst [vmem:[#allocation3 + $0x10] sm:$0xff] %v805
    %846 = vst [vmem:[#allocation3 + $0x18] sm:$0xff] %v807
    %847 = vst [vmem:[#allocation3 + $0x20] sm:$0xff] %v736
    %848 = vst [vmem:[#allocation3 + $0x28] sm:$0xff] %v738
    %849 = vst [vmem:[#allocation3 + $0x30] sm:$0xff] %v809
    %850 = vst [vmem:[#allocation3 + $0x38] sm:$0xff] %v811
    %851 = vst [vmem:[#allocation3 + $0x40] sm:$0xff] %v742
    %852 = vst [vmem:[#allocation3 + $0x48] sm:$0xff] %v744
    %853 = vst [vmem:[#allocation3 + $0x50] sm:$0xff] %v815
    %854 = vst [vmem:[#allocation3 + $0x58] sm:$0xff] %v817
    %855 = vst [vmem:[#allocation3 + $0x60] sm:$0xff] %v746
    %856 = vst [vmem:[#allocation3 + $0x68] sm:$0xff] %v748
    %857 = vst [vmem:[#allocation3 + $0x70] sm:$0xff] %v819
    %858 = vst [vmem:[#allocation3 + $0x78] sm:$0xff] %v821
    %859 = vst [vmem:[#allocation3 + $0x80] sm:$0xff] %v752
    %860 = vst [vmem:[#allocation3 + $0x88] sm:$0xff] %v754
    %861 = vst [vmem:[#allocation3 + $0x90] sm:$0xff] %v825
    %862 = vst [vmem:[#allocation3 + $0x98] sm:$0xff] %v827
    %863 = vst [vmem:[#allocation3 + $0xa0] sm:$0xff] %v756
    %864 = vst [vmem:[#allocation3 + $0xa8] sm:$0xff] %v758
    %865 = vst [vmem:[#allocation3 + $0xb0] sm:$0xff] %v829
    %866 = vst [vmem:[#allocation3 + $0xb8] sm:$0xff] %v831
    %867 = vst [vmem:[#allocation3 + $0xc0] sm:$0xff] %v762
    %868 = vst [vmem:[#allocation3 + $0xc8] sm:$0xff] %v764
    %869 = vst [vmem:[#allocation3 + $0xd0] sm:$0xff] %v835
    %870 = vst [vmem:[#allocation3 + $0xd8] sm:$0xff] %v837
    %871 = vst [vmem:[#allocation3 + $0xe0] sm:$0xff] %v766
    %872 = vst [vmem:[#allocation3 + $0xe8] sm:$0xff] %v768
    %873 = vst [vmem:[#allocation3 + $0xf0] sm:$0xff] %v839
    %874 = vst [vmem:[#allocation3 + $0xf8] sm:$0xff] %v841
    %v875 = vld [vmem:[%s3] sm:$0xff]
    %v876 = vld [vmem:[%s3 + $0x8] sm:$0xff]
    %v877 = vld [vmem:[%s3 + $0x10] sm:$0xff]
    %v878 = vld [vmem:[%s3 + $0x18] sm:$0xff]
    %v879 = vld [vmem:[%s3 + $0x20] sm:$0xff]
    %v880 = vld [vmem:[%s3 + $0x28] sm:$0xff]
    %v881 = vld [vmem:[%s3 + $0x30] sm:$0xff]
    %v882 = vld [vmem:[%s3 + $0x38] sm:$0xff]
    %v883 = vld [vmem:[%s3 + $0x40] sm:$0xff]
    %v884 = vld [vmem:[%s3 + $0x48] sm:$0xff]
    %v885 = vld [vmem:[%s3 + $0x50] sm:$0xff]
    %v886 = vld [vmem:[%s3 + $0x58] sm:$0xff]
    %v887 = vld [vmem:[%s3 + $0x60] sm:$0xff]
    %v888 = vld [vmem:[%s3 + $0x68] sm:$0xff]
    %v889 = vld [vmem:[%s3 + $0x70] sm:$0xff]
    %v890 = vld [vmem:[%s3 + $0x78] sm:$0xff]
    %v891 = vld [vmem:[%s3 + $0x80] sm:$0xff]
    %v892 = vld [vmem:[%s3 + $0x88] sm:$0xff]
    %v893 = vld [vmem:[%s3 + $0x90] sm:$0xff]
    %v894 = vld [vmem:[%s3 + $0x98] sm:$0xff]
    %v895 = vld [vmem:[%s3 + $0xa0] sm:$0xff]
    %v896 = vld [vmem:[%s3 + $0xa8] sm:$0xff]
    %v897 = vld [vmem:[%s3 + $0xb0] sm:$0xff]
    %v898 = vld [vmem:[%s3 + $0xb8] sm:$0xff]
    %v899 = vld [vmem:[%s3 + $0xc0] sm:$0xff]
    %v900 = vld [vmem:[%s3 + $0xc8] sm:$0xff]
    %v901 = vld [vmem:[%s3 + $0xd0] sm:$0xff]
    %v902 = vld [vmem:[%s3 + $0xd8] sm:$0xff]
    %v903 = vld [vmem:[%s3 + $0xe0] sm:$0xff]
    %v904 = vld [vmem:[%s3 + $0xe8] sm:$0xff]
    %v905 = vld [vmem:[%s3 + $0xf0] sm:$0xff]
    %v906 = vld [vmem:[%s3 + $0xf8] sm:$0xff]
    %v907 = vld [vmem:[%s3 + $0x100] sm:$0xff]
    %v908 = vld [vmem:[%s3 + $0x108] sm:$0xff]
    %v909 = vld [vmem:[%s3 + $0x110] sm:$0xff]
    %v910 = vld [vmem:[%s3 + $0x118] sm:$0xff]
    %v911 = vld [vmem:[%s3 + $0x120] sm:$0xff]
    %v912 = vld [vmem:[%s3 + $0x128] sm:$0xff]
    %v913 = vld [vmem:[%s3 + $0x130] sm:$0xff]
    %v914 = vld [vmem:[%s3 + $0x138] sm:$0xff]
    %v915 = vld [vmem:[%s3 + $0x140] sm:$0xff]
    %v916 = vld [vmem:[%s3 + $0x148] sm:$0xff]
    %v917 = vld [vmem:[%s3 + $0x150] sm:$0xff]
    %v918 = vld [vmem:[%s3 + $0x158] sm:$0xff]
    %v919 = vld [vmem:[%s3 + $0x160] sm:$0xff]
    %v920 = vld [vmem:[%s3 + $0x168] sm:$0xff]
    %v921 = vld [vmem:[%s3 + $0x170] sm:$0xff]
    %v922 = vld [vmem:[%s3 + $0x178] sm:$0xff]
    %v923 = vld [vmem:[%s3 + $0x180] sm:$0xff]
    %v924 = vld [vmem:[%s3 + $0x188] sm:$0xff]
    %v925 = vld [vmem:[%s3 + $0x190] sm:$0xff]
    %v926 = vld [vmem:[%s3 + $0x198] sm:$0xff]
    %v927 = vld [vmem:[%s3 + $0x1a0] sm:$0xff]
    %v928 = vld [vmem:[%s3 + $0x1a8] sm:$0xff]
    %v929 = vld [vmem:[%s3 + $0x1b0] sm:$0xff]
    %v930 = vld [vmem:[%s3 + $0x1b8] sm:$0xff]
    %v931 = vld [vmem:[%s3 + $0x1c0] sm:$0xff]
    %v932 = vld [vmem:[%s3 + $0x1c8] sm:$0xff]
    %v933 = vld [vmem:[%s3 + $0x1d0] sm:$0xff]
    %v934 = vld [vmem:[%s3 + $0x1d8] sm:$0xff]
    %v935 = vld [vmem:[%s3 + $0x1e0] sm:$0xff]
    %v936 = vld [vmem:[%s3 + $0x1e8] sm:$0xff]
    %v937 = vld [vmem:[%s3 + $0x1f0] sm:$0xff]
    %v938 = vld [vmem:[%s3 + $0x1f8] sm:$0xff]
    %v939 = vld [vmem:[%s6] sm:$0xff]
    %v940 = vld [vmem:[%s6 + $0x8] sm:$0xff]
    %v941 = vld [vmem:[%s6 + $0x10] sm:$0xff]
    %v942 = vld [vmem:[%s6 + $0x18] sm:$0xff]
    %v943 = vld [vmem:[%s6 + $0x20] sm:$0xff]
    %v944 = vld [vmem:[%s6 + $0x28] sm:$0xff]
    %v945 = vld [vmem:[%s6 + $0x30] sm:$0xff]
    %v946 = vld [vmem:[%s6 + $0x38] sm:$0xff]
    %v947 = vld [vmem:[%s6 + $0x40] sm:$0xff]
    %v948 = vld [vmem:[%s6 + $0x48] sm:$0xff]
    %v949 = vld [vmem:[%s6 + $0x50] sm:$0xff]
    %v950 = vld [vmem:[%s6 + $0x58] sm:$0xff]
    %v951 = vld [vmem:[%s6 + $0x60] sm:$0xff]
    %v952 = vld [vmem:[%s6 + $0x68] sm:$0xff]
    %v953 = vld [vmem:[%s6 + $0x70] sm:$0xff]
    %v954 = vld [vmem:[%s6 + $0x78] sm:$0xff]
    %v955 = vld [vmem:[%s6 + $0x80] sm:$0xff]
    %v956 = vld [vmem:[%s6 + $0x88] sm:$0xff]
    %v957 = vld [vmem:[%s6 + $0x90] sm:$0xff]
    %v958 = vld [vmem:[%s6 + $0x98] sm:$0xff]
    %v959 = vld [vmem:[%s6 + $0xa0] sm:$0xff]
    %v960 = vld [vmem:[%s6 + $0xa8] sm:$0xff]
    %v961 = vld [vmem:[%s6 + $0xb0] sm:$0xff]
    %v962 = vld [vmem:[%s6 + $0xb8] sm:$0xff]
    %v963 = vld [vmem:[%s6 + $0xc0] sm:$0xff]
    %v964 = vld [vmem:[%s6 + $0xc8] sm:$0xff]
    %v965 = vld [vmem:[%s6 + $0xd0] sm:$0xff]
    %v966 = vld [vmem:[%s6 + $0xd8] sm:$0xff]
    %v967 = vld [vmem:[%s6 + $0xe0] sm:$0xff]
    %v968 = vld [vmem:[%s6 + $0xe8] sm:$0xff]
    %v969 = vld [vmem:[%s6 + $0xf0] sm:$0xff]
    %v970 = vld [vmem:[%s6 + $0xf8] sm:$0xff]
    %v971 = vld [vmem:[%s6 + $0x100] sm:$0xff]
    %v972 = vld [vmem:[%s6 + $0x108] sm:$0xff]
    %v973 = vld [vmem:[%s6 + $0x110] sm:$0xff]
    %v974 = vld [vmem:[%s6 + $0x118] sm:$0xff]
    %v975 = vld [vmem:[%s6 + $0x120] sm:$0xff]
    %v976 = vld [vmem:[%s6 + $0x128] sm:$0xff]
    %v977 = vld [vmem:[%s6 + $0x130] sm:$0xff]
    %v978 = vld [vmem:[%s6 + $0x138] sm:$0xff]
    %v979 = vld [vmem:[%s6 + $0x140] sm:$0xff]
    %v980 = vld [vmem:[%s6 + $0x148] sm:$0xff]
    %v981 = vld [vmem:[%s6 + $0x150] sm:$0xff]
    %v982 = vld [vmem:[%s6 + $0x158] sm:$0xff]
    %v983 = vld [vmem:[%s6 + $0x160] sm:$0xff]
    %v984 = vld [vmem:[%s6 + $0x168] sm:$0xff]
    %v985 = vld [vmem:[%s6 + $0x170] sm:$0xff]
    %v986 = vld [vmem:[%s6 + $0x178] sm:$0xff]
    %v987 = vld [vmem:[%s6 + $0x180] sm:$0xff]
    %v988 = vld [vmem:[%s6 + $0x188] sm:$0xff]
    %v989 = vld [vmem:[%s6 + $0x190] sm:$0xff]
    %v990 = vld [vmem:[%s6 + $0x198] sm:$0xff]
    %v991 = vld [vmem:[%s6 + $0x1a0] sm:$0xff]
    %v992 = vld [vmem:[%s6 + $0x1a8] sm:$0xff]
    %v993 = vld [vmem:[%s6 + $0x1b0] sm:$0xff]
    %v994 = vld [vmem:[%s6 + $0x1b8] sm:$0xff]
    %v995 = vld [vmem:[%s6 + $0x1c0] sm:$0xff]
    %v996 = vld [vmem:[%s6 + $0x1c8] sm:$0xff]
    %v997 = vld [vmem:[%s6 + $0x1d0] sm:$0xff]
    %v998 = vld [vmem:[%s6 + $0x1d8] sm:$0xff]
    %v999 = vld [vmem:[%s6 + $0x1e0] sm:$0xff]
    %v1000 = vld [vmem:[%s6 + $0x1e8] sm:$0xff]
    %v1001 = vld [vmem:[%s6 + $0x1f0] sm:$0xff]
    %v1002 = vld [vmem:[%s6 + $0x1f8] sm:$0xff]
    %v1003 = vld [vmem:[%s8] sm:$0xff]
    %v1004 = vld [vmem:[%s8 + $0x8] sm:$0xff]
    %v1005 = vld [vmem:[%s8 + $0x10] sm:$0xff]
    %v1006 = vld [vmem:[%s8 + $0x18] sm:$0xff]
    %v1007 = vld [vmem:[%s8 + $0x20] sm:$0xff]
    %v1008 = vld [vmem:[%s8 + $0x28] sm:$0xff]
    %v1009 = vld [vmem:[%s8 + $0x30] sm:$0xff]
    %v1010 = vld [vmem:[%s8 + $0x38] sm:$0xff]
    %v1011 = vld [vmem:[%s8 + $0x40] sm:$0xff]
    %v1012 = vld [vmem:[%s8 + $0x48] sm:$0xff]
    %v1013 = vld [vmem:[%s8 + $0x50] sm:$0xff]
    %v1014 = vld [vmem:[%s8 + $0x58] sm:$0xff]
    %v1015 = vld [vmem:[%s8 + $0x60] sm:$0xff]
    %v1016 = vld [vmem:[%s8 + $0x68] sm:$0xff]
    %v1017 = vld [vmem:[%s8 + $0x70] sm:$0xff]
    %v1018 = vld [vmem:[%s8 + $0x78] sm:$0xff]
    %v1019 = vld [vmem:[#allocation4] sm:$0xff]
    %v1020 = vld [vmem:[#allocation4 + $0x8] sm:$0xff]
    %v1021 = vld [vmem:[#allocation4 + $0x10] sm:$0xff]
    %v1022 = vld [vmem:[#allocation4 + $0x18] sm:$0xff]
    %v1023 = vld [vmem:[#allocation4 + $0x20] sm:$0xff]
    %v1024 = vld [vmem:[#allocation4 + $0x28] sm:$0xff]
    %v1025 = vld [vmem:[#allocation4 + $0x30] sm:$0xff]
    %v1026 = vld [vmem:[#allocation4 + $0x38] sm:$0xff]
    %v1027 = vld [vmem:[#allocation4 + $0x40] sm:$0xff]
    %v1028 = vld [vmem:[#allocation4 + $0x48] sm:$0xff]
    %v1029 = vld [vmem:[#allocation4 + $0x50] sm:$0xff]
    %v1030 = vld [vmem:[#allocation4 + $0x58] sm:$0xff]
    %v1031 = vld [vmem:[#allocation4 + $0x60] sm:$0xff]
    %v1032 = vld [vmem:[#allocation4 + $0x68] sm:$0xff]
    %v1033 = vld [vmem:[#allocation4 + $0x70] sm:$0xff]
    %v1034 = vld [vmem:[#allocation4 + $0x78] sm:$0xff]
    %v1035 = vld [vmem:[%s10] sm:$0x1]
    %v1037 = vlaneseq
    %v1038 = vshrl.u32 %v1037, 7
    %v1039 = vsub.s32 0, %v1038
    %v1040 = vrot.slane %v1035, %v1039
    %1042 = vst [vmem:[%s12] sm:$0xff] %v1040
    %1043 = vst [vmem:[%s12 + $0x8] sm:$0xff] %v1040
    %1044 = vst [vmem:[%s12 + $0x10] sm:$0xff] %v1040
    %1045 = vst [vmem:[%s12 + $0x18] sm:$0xff] %v1040
    %1046 = vst [vmem:[%s12 + $0x20] sm:$0xff] %v1040
    %1047 = vst [vmem:[%s12 + $0x28] sm:$0xff] %v1040
    %1048 = vst [vmem:[%s12 + $0x30] sm:$0xff] %v1040
    %1049 = vst [vmem:[%s12 + $0x38] sm:$0xff] %v1040
    loop: start=0, step=1, limit=8
    $region54: #{bilstm_crf_loss.1} parent=1 // loop_pre_header
      _
    $region55: #{bilstm_crf_loss.1} parent=1 // loop_header
      %s1051 = sphi 0, %s1055
      %p1052 = scmp.ge.s32.totalorder %s1051, 8
      %v1056 = vphi 0.0, %v1248
      %v1057 = vphi 0.0, %v1247
      %v1058 = vphi 0.0, %v1508
      %v1059 = vphi 0.0, %v1507
    $region56: #{bilstm_crf_loss.1} parent=1 // loop_header_branch
      %1054 = sbr.rel (%p1052) target = $region60
    $region57: #{bilstm_crf_loss.1} parent=1 // loop_body
      %s1060 = ssub.s32 7, %s1051
      %v1061 = vstv %s1051
      %vm1062 = vcmp.gt.s32.totalorder %v58, %v1061
      %v1063 = vstv %s1060
      %vm1064 = vcmp.gt.s32.totalorder %v58, %v1063
      %s1065 = smul.u32 %s1051, 4
      %s1066 = smul.addr %s1065, 8
      %s1067 = scalar_lea.vmem [#allocation2], %s1066
      %v1068 = vld [vmem:[%s1067] sm:$0xff]
      %v1069 = vld [vmem:[%s1067 + $0x8] sm:$0xff]
      %v1070 = vld [vmem:[%s1067 + $0x10] sm:$0xff]
      %v1071 = vld [vmem:[%s1067 + $0x18] sm:$0xff]
      %1072 = vmatprep.subr.mxu0 %v936
      %1073 = vmatpush1.msra.mxu0 %v935
      %1074 = vmatprep.subr.mxu0 %v932
      %1075 = vmatpush1.msra.mxu0 %v931
      %1076 = vmatprep.subr.mxu0 %v928
      %1077 = vmatpush1.msra.mxu0 %v927
      %1078 = vmatprep.subr.mxu0 %v924
      %1079 = vmatpush1.msra.mxu0 %v923
      %1080 = vmatprep.subr.mxu0 %v920
      %1081 = vmatpush1.msra.mxu0 %v919
      %1082 = vmatprep.subr.mxu0 %v916
      %1083 = vmatpush1.msra.mxu0 %v915
      %1084 = vmatprep.subr.mxu0 %v912
      %1085 = vmatpush1.msra.mxu0 %v911
      %1086 = vmatprep.subr.mxu0 %v908
      %1087 = vmatpush1.msra.mxu0 %v907
      %1088 = vmatprep.subr.mxu0 %v904
      %1089 = vmatpush1.msra.mxu0 %v903
      %1090 = vmatprep.subr.mxu0 %v900
      %1091 = vmatpush1.msra.mxu0 %v899
      %1092 = vmatprep.subr.mxu0 %v896
      %1093 = vmatpush1.msra.mxu0 %v895
      %1094 = vmatprep.subr.mxu0 %v892
      %1095 = vmatpush1.msra.mxu0 %v891
      %1096 = vmatprep.subr.mxu0 %v888
      %1097 = vmatpush1.msra.mxu0 %v887
      %1098 = vmatprep.subr.mxu0 %v884
      %1099 = vmatpush1.msra.mxu0 %v883
      %1100 = vmatprep.subr.mxu0 %v880
      %1101 = vmatpush1.msra.mxu0 %v879
      %1102 = vmatprep.subr.mxu0 %v876
      %1103 = vmatpush1.msra.mxu0 %v875
      %1104 = vmatprep.subr.mxu0 0.0
      %1105 = vmatpush2.msra.mxu0 0.0
      %1106 = vmatprep.subr.mxu0 0.0
      %1107 = vmatpush2.msra.mxu0 0.0
      %1108 = vmatprep.subr.mxu0 0.0
      %1109 = vmatpush2.msra.mxu0 0.0
      %1110 = vmatprep.subr.mxu0 0.0
      %1111 = vmatpush2.msra.mxu0 0.0
      %1112 = vmatprep.subr.mxu0 0.0
      %1113 = vmatpush2.msra.mxu0 0.0
      %1114 = vmatprep.subr.mxu0 0.0
      %1115 = vmatpush2.msra.mxu0 0.0
      %1116 = vmatprep.subr.mxu0 0.0
      %1117 = vmatpush2.msra.mxu0 0.0
      %1118 = vmatprep.subr.mxu0 0.0
      %1119 = vmatpush2.msra.mxu0 0.0
      %1120 = vmatprep.subr.mxu0 0.0
      %1121 = vmatpush2.msra.mxu0 0.0
      %1122 = vmatprep.subr.mxu0 0.0
      %1123 = vmatpush2.msra.mxu0 0.0
      %1124 = vmatprep.subr.mxu0 0.0
      %1125 = vmatpush2.msra.mxu0 0.0
      %1126 = vmatprep.subr.mxu0 0.0
      %1127 = vmatpush2.msra.mxu0 0.0
      %1128 = vmatprep.subr.mxu0 0.0
      %1129 = vmatpush2.msra.mxu0 0.0
      %1130 = vmatprep.subr.mxu0 0.0
      %1131 = vmatpush2.msra.mxu0 0.0
      %1132 = vmatprep.subr.mxu0 0.0
      %1133 = vmatpush2.msra.mxu0 0.0
      %1134 = vmatprep.subr.mxu0 0.0
      %1135 = vmatpush2.msra.mxu0 0.0
      %1136 = vmatprep.mubr.f32.mxu0 0.0
      %1137 = vmatmul.mubr.f32.gmra.mxu0 %v1056
      %v1138 = vpop.f32.mrf.mxu0
      %v1139 = vadd.f32 0.0, %v1138
      %v1140 = vpop.f32.mrf.mxu0
      %v1141 = vadd.f32 0.0, %v1140
      %1142 = vdwg.mxu0
      %1143 = vmatprep.subr.mxu0 %v938
      %1144 = vmatpush1.msra.mxu0 %v937
      %1145 = vmatprep.subr.mxu0 %v934
      %1146 = vmatpush1.msra.mxu0 %v933
      %1147 = vmatprep.subr.mxu0 %v930
      %1148 = vmatpush1.msra.mxu0 %v929
      %1149 = vmatprep.subr.mxu0 %v926
      %1150 = vmatpush1.msra.mxu0 %v925
      %1151 = vmatprep.subr.mxu0 %v922
      %1152 = vmatpush1.msra.mxu0 %v921
      %1153 = vmatprep.subr.mxu0 %v918
      %1154 = vmatpush1.msra.mxu0 %v917
      %1155 = vmatprep.subr.mxu0 %v914
      %1156 = vmatpush1.msra.mxu0 %v913
      %1157 = vmatprep.subr.mxu0 %v910
      %1158 = vmatpush1.msra.mxu0 %v909
      %1159 = vmatprep.subr.mxu0 %v906
      %1160 = vmatpush1.msra.mxu0 %v905
      %1161 = vmatprep.subr.mxu0 %v902
      %1162 = vmatpush1.msra.mxu0 %v901
      %1163 = vmatprep.subr.mxu0 %v898
      %1164 = vmatpush1.msra.mxu0 %v897
      %1165 = vmatprep.subr.mxu0 %v894
      %1166 = vmatpush1.msra.mxu0 %v893
      %1167 = vmatprep.subr.mxu0 %v890
      %1168 = vmatpush1.msra.mxu0 %v889
      %1169 = vmatprep.subr.mxu0 %v886
      %1170 = vmatpush1.msra.mxu0 %v885
      %1171 = vmatprep.subr.mxu0 %v882
      %1172 = vmatpush1.msra.mxu0 %v881
      %1173 = vmatprep.subr.mxu0 %v878
      %1174 = vmatpush1.msra.mxu0 %v877
      %1175 = vmatprep.subr.mxu0 0.0
      %1176 = vmatpush2.msra.mxu0 0.0
      %1177 = vmatprep.subr.mxu0 0.0
      %1178 = vmatpush2.msra.mxu0 0.0
      %1179 = vmatprep.subr.mxu0 0.0
      %1180 = vmatpush2.msra.mxu0 0.0
      %1181 = vmatprep.subr.mxu0 0.0
      %1182 = vmatpush2.msra.mxu0 0.0
      %1183 = vmatprep.subr.mxu0 0.0
      %1184 = vmatpush2.msra.mxu0 0.0
      %1185 = vmatprep.subr.mxu0 0.0
      %1186 = vmatpush2.msra.mxu0 0.0
      %1187 = vmatprep.subr.mxu0 0.0
      %1188 = vmatpush2.msra.mxu0 0.0
      %1189 = vmatprep.subr.mxu0 0.0
      %1190 = vmatpush2.msra.mxu0 0.0
      %1191 = vmatprep.subr.mxu0 0.0
      %1192 = vmatpush2.msra.mxu0 0.0
      %1193 = vmatprep.subr.mxu0 0.0
      %1194 = vmatpush2.msra.mxu0 0.0
      %1195 = vmatprep.subr.mxu0 0.0
      %1196 = vmatpush2.msra.mxu0 0.0
      %1197 = vmatprep.subr.mxu0 0.0
      %1198 = vmatpush2.msra.mxu0 0.0
      %1199 = vmatprep.subr.mxu0 0.0
      %1200 = vmatpush2.msra.mxu0 0.0
      %1201 = vmatprep.subr.mxu0 0.0
      %1202 = vmatpush2.msra.mxu0 0.0
      %1203 = vmatprep.subr.mxu0 0.0
      %1204 = vmatpush2.msra.mxu0 0.0
      %1205 = vmatprep.subr.mxu0 0.0
      %1206 = vmatpush2.msra.mxu0 0.0
      %1207 = vmatprep.mubr.f32.mxu0 0.0
      %1208 = vmatmul.mubr.f32.gmra.mxu0 %v1056
      %v1209 = vpop.f32.mrf.mxu0
      %v1210 = vadd.f32 0.0, %v1209
      %v1211 = vpop.f32.mrf.mxu0
      %v1212 = vadd.f32 0.0, %v1211
      %1213 = vdwg.mxu0
      %v1214 = vadd.f32 %v1068, %v1139
      %v1215 = vadd.f32 %v1069, %v1141
      %v1216 = vadd.f32 %v1070, %v1210
      %v1217 = vadd.f32 %v1071, %v1212
      %v1218 = vxor.u32 %v1214, 2147483648
      %v1219 = vmul.f32 %v1218, 1.442695
      %v1220 = vpow.pop %v1219
      %v1221 = vadd.f32 %v1220, 1.0
      %v1222 = vrcp.pop %v1221
      %v1223 = vmul.f32 1.0, %v1222
      %v1224 = vxor.u32 %v1215, 2147483648
      %v1225 = vmul.f32 %v1224, 1.442695
      %v1226 = vpow.pop %v1225
      %v1227 = vadd.f32 %v1226, 1.0
      %v1228 = vrcp.pop %v1227
      %v1229 = vmul.f32 1.0, %v1228
      %v1230 = vtanh.pop %v1216
      %v1231 = vxor.u32 %v1217, 2147483648
      %v1232 = vmul.f32 %v1231, 1.442695
      %v1233 = vpow.pop %v1232
      %v1234 = vadd.f32 %v1233, 1.0
      %v1235 = vrcp.pop %v1234
      %v1236 = vmul.f32 1.0, %v1235
      %v1237 = vmul.f32 %v1229, %v1057
      %v1238 = vmul.f32 %v1223, %v1230
      %v1239 = vadd.f32 %v1237, %v1238
      %v1240 = vtanh.pop %v1239
      %v1241 = vmul.f32 %v1236, %v1240
      %v1242 = vsel %vm1062, 1, 0
      %1243 = vset.pattern.permute.xlu0 0
      %1244 = vperm.xlu0 %1243, %v1242
      %v1245 = vpop.permute.xlu0 %1244
      %vm1246 = vcmp.eq.s32.totalorder %v1245, 1
      %v1247 = vsel %vm1246, %v1239, %v1057
      %v1248 = vsel %vm1246, %v1241, %v1056
      %v1249 = vsel %vm1246, %v1241, 0.0
      %s1250 = smul.u32 %s1051, 8
      %s1251 = scalar_lea.vmem %s12, %s1250
      %v1252 = vld [vmem:[%s1251] sm:$0xff]
      %1253 = vmatprep.subr.mxu0 0.0
      %1254 = vmatpush1.msra.mxu0 %v1018
      %1255 = vmatprep.subr.mxu0 0.0
      %1256 = vmatpush1.msra.mxu0 %v1017
      %1257 = vmatprep.subr.mxu0 0.0
      %1258 = vmatpush1.msra.mxu0 %v1016
      %1259 = vmatprep.subr.mxu0 0.0
      %1260 = vmatpush1.msra.mxu0 %v1015
      %1261 = vmatprep.subr.mxu0 0.0
      %1262 = vmatpush1.msra.mxu0 %v1014
      %1263 = vmatprep.subr.mxu0 0.0
      %1264 = vmatpush1.msra.mxu0 %v1013
      %1265 = vmatprep.subr.mxu0 0.0
      %1266 = vmatpush1.msra.mxu0 %v1012
      %1267 = vmatprep.subr.mxu0 0.0
      %1268 = vmatpush1.msra.mxu0 %v1011
      %1269 = vmatprep.subr.mxu0 0.0
      %1270 = vmatpush1.msra.mxu0 %v1010
      %1271 = vmatprep.subr.mxu0 0.0
      %1272 = vmatpush1.msra.mxu0 %v1009
      %1273 = vmatprep.subr.mxu0 0.0
      %1274 = vmatpush1.msra.mxu0 %v1008
      %1275 = vmatprep.subr.mxu0 0.0
      %1276 = vmatpush1.msra.mxu0 %v1007
      %1277 = vmatprep.subr.mxu0 0.0
      %1278 = vmatpush1.msra.mxu0 %v1006
      %1279 = vmatprep.subr.mxu0 0.0
      %1280 = vmatpush1.msra.mxu0 %v1005
      %1281 = vmatprep.subr.mxu0 0.0
      %1282 = vmatpush1.msra.mxu0 %v1004
      %1283 = vmatprep.subr.mxu0 0.0
      %1284 = vmatpush1.msra.mxu0 %v1003
      %1285 = vmatprep.subr.mxu0 0.0
      %1286 = vmatpush2.msra.mxu0 0.0
      %1287 = vmatprep.subr.mxu0 0.0
      %1288 = vmatpush2.msra.mxu0 0.0
      %1289 = vmatprep.subr.mxu0 0.0
      %1290 = vmatpush2.msra.mxu0 0.0
      %1291 = vmatprep.subr.mxu0 0.0
      %1292 = vmatpush2.msra.mxu0 0.0
      %1293 = vmatprep.subr.mxu0 0.0
      %1294 = vmatpush2.msra.mxu0 0.0
      %1295 = vmatprep.subr.mxu0 0.0
      %1296 = vmatpush2.msra.mxu0 0.0
      %1297 = vmatprep.subr.mxu0 0.0
      %1298 = vmatpush2.msra.mxu0 0.0
      %1299 = vmatprep.subr.mxu0 0.0
      %1300 = vmatpush2.msra.mxu0 0.0
      %1301 = vmatprep.subr.mxu0 0.0
      %1302 = vmatpush2.msra.mxu0 0.0
      %1303 = vmatprep.subr.mxu0 0.0
      %1304 = vmatpush2.msra.mxu0 0.0
      %1305 = vmatprep.subr.mxu0 0.0
      %1306 = vmatpush2.msra.mxu0 0.0
      %1307 = vmatprep.subr.mxu0 0.0
      %1308 = vmatpush2.msra.mxu0 0.0
      %1309 = vmatprep.subr.mxu0 0.0
      %1310 = vmatpush2.msra.mxu0 0.0
      %1311 = vmatprep.subr.mxu0 0.0
      %1312 = vmatpush2.msra.mxu0 0.0
      %1313 = vmatprep.subr.mxu0 0.0
      %1314 = vmatpush2.msra.mxu0 0.0
      %1315 = vmatprep.subr.mxu0 0.0
      %1316 = vmatpush2.msra.mxu0 0.0
      %1317 = vmatprep.mubr.f32.mxu0 0.0
      %1318 = vmatmul.mubr.f32.gmra.mxu0 %v1249
      %v1319 = vpop.f32.mrf.mxu0
      %v1320 = vadd.f32 0.0, %v1319
      %v1321 = vpop.f32.mrf.mxu0
      %1322 = vdwg.mxu0
      %v1323 = vadd.f32 %v1252, %v1320
      %1324 = vst [vmem:[%s1251] sm:$0xff] %v1323
      %s1325 = smul.u32 %s1060, 4
      %s1326 = smul.addr %s1325, 8
      %s1327 = scalar_lea.vmem [#allocation3], %s1326
      %v1328 = vld [vmem:[%s1327] sm:$0xff]
      %v1329 = vld [vmem:[%s1327 + $0x8] sm:$0xff]
      %v1330 = vld [vmem:[%s1327 + $0x10] sm:$0xff]
      %v1331 = vld [vmem:[%s1327 + $0x18] sm:$0xff]
      %1332 = vmatprep.subr.mxu0 %v1000
      %1333 = vmatpush1.msra.mxu0 %v999
      %1334 = vmatprep.subr.mxu0 %v996
      %1335 = vmatpush1.msra.mxu0 %v995
      %1336 = vmatprep.subr.mxu0 %v992
      %1337 = vmatpush1.msra.mxu0 %v991
      %1338 = vmatprep.subr.mxu0 %v988
      %1339 = vmatpush1.msra.mxu0 %v987
      %1340 = vmatprep.subr.mxu0 %v984
      %1341 = vmatpush1.msra.mxu0 %v983
      %1342 = vmatprep.subr.mxu0 %v980
      %1343 = vmatpush1.msra.mxu0 %v979
      %1344 = vmatprep.subr.mxu0 %v976
      %1345 = vmatpush1.msra.mxu0 %v975
      %1346 = vmatprep.subr.mxu0 %v972
      %1347 = vmatpush1.msra.mxu0 %v971
      %1348 = vmatprep.subr.mxu0 %v968
      %1349 = vmatpush1.msra.mxu0 %v967
      %1350 = vmatprep.subr.mxu0 %v964
      %1351 = vmatpush1.msra.mxu0 %v963
      %1352 = vmatprep.subr.mxu0 %v960
      %1353 = vmatpush1.msra.mxu0 %v959
      %1354 = vmatprep.subr.mxu0 %v956
      %1355 = vmatpush1.msra.mxu0 %v955
      %1356 = vmatprep.subr.mxu0 %v952
      %1357 = vmatpush1.msra.mxu0 %v951
      %1358 = vmatprep.subr.mxu0 %v948
      %1359 = vmatpush1.msra.mxu0 %v947
      %1360 = vmatprep.subr.mxu0 %v944
      %1361 = vmatpush1.msra.mxu0 %v943
      %1362 = vmatprep.subr.mxu0 %v940
      %1363 = vmatpush1.msra.mxu0 %v939
      %1364 = vmatprep.subr.mxu0 0.0
      %1365 = vmatpush2.msra.mxu0 0.0
      %1366 = vmatprep.subr.mxu0 0.0
      %1367 = vmatpush2.msra.mxu0 0.0
      %1368 = vmatprep.subr.mxu0 0.0
      %1369 = vmatpush2.msra.mxu0 0.0
      %1370 = vmatprep.subr.mxu0 0.0
      %1371 = vmatpush2.msra.mxu0 0.0
      %1372 = vmatprep.subr.mxu0 0.0
      %1373 = vmatpush2.msra.mxu0 0.0
      %1374 = vmatprep.subr.mxu0 0.0
      %1375 = vmatpush2.msra.mxu0 0.0
      %1376 = vmatprep.subr.mxu0 0.0
      %1377 = vmatpush2.msra.mxu0 0.0
      %1378 = vmatprep.subr.mxu0 0.0
      %1379 = vmatpush2.msra.mxu0 0.0
      %1380 = vmatprep.subr.mxu0 0.0
      %1381 = vmatpush2.msra.mxu0 0.0
      %1382 = vmatprep.subr.mxu0 0.0
      %1383 = vmatpush2.msra.mxu0 0.0
      %1384 = vmatprep.subr.mxu0 0.0
      %1385 = vmatpush2.msra.mxu0 0.0
      %1386 = vmatprep.subr.mxu0 0.0
      %1387 = vmatpush2.msra.mxu0 0.0
      %1388 = vmatprep.subr.mxu0 0.0
      %1389 = vmatpush2.msra.mxu0 0.0
      %1390 = vmatprep.subr.mxu0 0.0
      %1391 = vmatpush2.msra.mxu0 0.0
      %1392 = vmatprep.subr.mxu0 0.0
      %1393 = vmatpush2.msra.mxu0 0.0
      %1394 = vmatprep.subr.mxu0 0.0
      %1395 = vmatpush2.msra.mxu0 0.0
      %1396 = vmatprep.mubr.f32.mxu0 0.0
      %1397 = vmatmul.mubr.f32.gmra.mxu0 %v1058
      %v1398 = vpop.f32.mrf.mxu0
      %v1399 = vadd.f32 0.0, %v1398
      %v1400 = vpop.f32.mrf.mxu0
      %v1401 = vadd.f32 0.0, %v1400
      %1402 = vdwg.mxu0
      %1403 = vmatprep.subr.mxu0 %v1002
      %1404 = vmatpush1.msra.mxu0 %v1001
      %1405 = vmatprep.subr.mxu0 %v998
      %1406 = vmatpush1.msra.mxu0 %v997
      %1407 = vmatprep.subr.mxu0 %v994
      %1408 = vmatpush1.msra.mxu0 %v993
      %1409 = vmatprep.subr.mxu0 %v990
      %1410 = vmatpush1.msra.mxu0 %v989
      %1411 = vmatprep.subr.mxu0 %v986
      %1412 = vmatpush1.msra.mxu0 %v985
      %1413 = vmatprep.subr.mxu0 %v982
      %1414 = vmatpush1.msra.mxu0 %v981
      %1415 = vmatprep.subr.mxu0 %v978
      %1416 = vmatpush1.msra.mxu0 %v977
      %1417 = vmatprep.subr.mxu0 %v974
      %1418 = vmatpush1.msra.mxu0 %v973
      %1419 = vmatprep.subr.mxu0 %v970
      %1420 = vmatpush1.msra.mxu0 %v969
      %1421 = vmatprep.subr.mxu0 %v966
      %1422 = vmatpush1.msra.mxu0 %v965
      %1423 = vmatprep.subr.mxu0 %v962
      %1424 = vmatpush1.msra.mxu0 %v961
      %1425 = vmatprep.subr.mxu0 %v958
      %1426 = vmatpush1.msra.mxu0 %v957
      %1427 = vmatprep.subr.mxu0 %v954
      %1428 = vmatpush1.msra.mxu0 %v953
      %1429 = vmatprep.subr.mxu0 %v950
      %1430 = vmatpush1.msra.mxu0 %v949
      %1431 = vmatprep.subr.mxu0 %v946
      %1432 = vmatpush1.msra.mxu0 %v945
      %1433 = vmatprep.subr.mxu0 %v942
      %1434 = vmatpush1.msra.mxu0 %v941
      %1435 = vmatprep.subr.mxu0 0.0
      %1436 = vmatpush2.msra.mxu0 0.0
      %1437 = vmatprep.subr.mxu0 0.0
      %1438 = vmatpush2.msra.mxu0 0.0
      %1439 = vmatprep.subr.mxu0 0.0
      %1440 = vmatpush2.msra.mxu0 0.0
      %1441 = vmatprep.subr.mxu0 0.0
      %1442 = vmatpush2.msra.mxu0 0.0
      %1443 = vmatprep.subr.mxu0 0.0
      %1444 = vmatpush2.msra.mxu0 0.0
      %1445 = vmatprep.subr.mxu0 0.0
      %1446 = vmatpush2.msra.mxu0 0.0
      %1447 = vmatprep.subr.mxu0 0.0
      %1448 = vmatpush2.msra.mxu0 0.0
      %1449 = vmatprep.subr.mxu0 0.0
      %1450 = vmatpush2.msra.mxu0 0.0
      %1451 = vmatprep.subr.mxu0 0.0
      %1452 = vmatpush2.msra.mxu0 0.0
      %1453 = vmatprep.subr.mxu0 0.0
      %1454 = vmatpush2.msra.mxu0 0.0
      %1455 = vmatprep.subr.mxu0 0.0
      %1456 = vmatpush2.msra.mxu0 0.0
      %1457 = vmatprep.subr.mxu0 0.0
      %1458 = vmatpush2.msra.mxu0 0.0
      %1459 = vmatprep.subr.mxu0 0.0
      %1460 = vmatpush2.msra.mxu0 0.0
      %1461 = vmatprep.subr.mxu0 0.0
      %1462 = vmatpush2.msra.mxu0 0.0
      %1463 = vmatprep.subr.mxu0 0.0
      %1464 = vmatpush2.msra.mxu0 0.0
      %1465 = vmatprep.subr.mxu0 0.0
      %1466 = vmatpush2.msra.mxu0 0.0
      %1467 = vmatprep.mubr.f32.mxu0 0.0
      %1468 = vmatmul.mubr.f32.gmra.mxu0 %v1058
      %v1469 = vpop.f32.mrf.mxu0
      %v1470 = vadd.f32 0.0, %v1469
      %v1471 = vpop.f32.mrf.mxu0
      %v1472 = vadd.f32 0.0, %v1471
      %1473 = vdwg.mxu0
      %v1474 = vadd.f32 %v1328, %v1399
      %v1475 = vadd.f32 %v1329, %v1401
      %v1476 = vadd.f32 %v1330, %v1470
      %v1477 = vadd.f32 %v1331, %v1472
      %v1478 = vxor.u32 %v1474, 2147483648
      %v1479 = vmul.f32 %v1478, 1.442695
      %v1480 = vpow.pop %v1479
      %v1481 = vadd.f32 %v1480, 1.0
      %v1482 = vrcp.pop %v1481
      %v1483 = vmul.f32 1.0, %v1482
      %v1484 = vxor.u32 %v1475, 2147483648
      %v1485 = vmul.f32 %v1484, 1.442695
      %v1486 = vpow.pop %v1485
      %v1487 = vadd.f32 %v1486, 1.0
      %v1488 = vrcp.pop %v1487
      %v1489 = vmul.f32 1.0, %v1488
      %v1490 = vtanh.pop %v1476
      %v1491 = vxor.u32 %v1477, 2147483648
      %v1492 = vmul.f32 %v1491, 1.442695
      %v1493 = vpow.pop %v1492
      %v1494 = vadd.f32 %v1493, 1.0
      %v1495 = vrcp.pop %v1494
      %v1496 = vmul.f32 1.0, %v1495
      %v1497 = vmul.f32 %v1489, %v1059
      %v1498 = vmul.f32 %v1483, %v1490
      %v1499 = vadd.f32 %v1497, %v1498
      %v1500 = vtanh.pop %v1499
      %v1501 = vmul.f32 %v1496, %v1500
      %v1502 = vsel %vm1064, 1, 0
      %1503 = vset.pattern.permute.xlu0 0
      %1504 = vperm.xlu0 %1503, %v1502
      %v1505 = vpop.permute.xlu0 %1504
      %vm1506 = vcmp.eq.s32.totalorder %v1505, 1
      %v1507 = vsel %vm1506, %v1499, %v1059
      %v1508 = vsel %vm1506, %v1501, %v1058
      %s1509 = smul.u32 %s1060, 8
      %s1510 = scalar_lea.vmem %s12, %s1509
      %v1511 = vld [vmem:[%s1510] sm:$0xff]
      %1512 = vmatprep.subr.mxu0 0.0
      %1513 = vmatpush1.msra.mxu0 %v1034
      %1514 = vmatprep.subr.mxu0 0.0
      %1515 = vmatpush1.msra.mxu0 %v1033
      %1516 = vmatprep.subr.mxu0 0.0
      %1517 = vmatpush1.msra.mxu0 %v1032
      %1518 = vmatprep.subr.mxu0 0.0
      %1519 = vmatpush1.msra.mxu0 %v1031
      %1520 = vmatprep.subr.mxu0 0.0
      %1521 = vmatpush1.msra.mxu0 %v1030
      %1522 = vmatprep.subr.mxu0 0.0
      %1523 = vmatpush1.msra.mxu0 %v1029
      %1524 = vmatprep.subr.mxu0 0.0
      %1525 = vmatpush1.msra.mxu0 %v1028
      %1526 = vmatprep.subr.mxu0 0.0
      %1527 = vmatpush1.msra.mxu0 %v1027
      %1528 = vmatprep.subr.mxu0 0.0
      %1529 = vmatpush1.msra.mxu0 %v1026
      %1530 = vmatprep.subr.mxu0 0.0
      %1531 = vmatpush1.msra.mxu0 %v1025
      %1532 = vmatprep.subr.mxu0 0.0
      %1533 = vmatpush1.msra.mxu0 %v1024
      %1534 = vmatprep.subr.mxu0 0.0
      %1535 = vmatpush1.msra.mxu0 %v1023
      %1536 = vmatprep.subr.mxu0 0.0
      %1537 = vmatpush1.msra.mxu0 %v1022
      %1538 = vmatprep.subr.mxu0 0.0
      %1539 = vmatpush1.msra.mxu0 %v1021
      %1540 = vmatprep.subr.mxu0 0.0
      %1541 = vmatpush1.msra.mxu0 %v1020
      %1542 = vmatprep.subr.mxu0 0.0
      %1543 = vmatpush1.msra.mxu0 %v1019
      %1544 = vmatprep.subr.mxu0 0.0
      %1545 = vmatpush2.msra.mxu0 0.0
      %1546 = vmatprep.subr.mxu0 0.0
      %1547 = vmatpush2.msra.mxu0 0.0
      %1548 = vmatprep.subr.mxu0 0.0
      %1549 = vmatpush2.msra.mxu0 0.0
      %1550 = vmatprep.subr.mxu0 0.0
      %1551 = vmatpush2.msra.mxu0 0.0
      %1552 = vmatprep.subr.mxu0 0.0
      %1553 = vmatpush2.msra.mxu0 0.0
      %1554 = vmatprep.subr.mxu0 0.0
      %1555 = vmatpush2.msra.mxu0 0.0
      %1556 = vmatprep.subr.mxu0 0.0
      %1557 = vmatpush2.msra.mxu0 0.0
      %1558 = vmatprep.subr.mxu0 0.0
      %1559 = vmatpush2.msra.mxu0 0.0
      %1560 = vmatprep.subr.mxu0 0.0
      %1561 = vmatpush2.msra.mxu0 0.0
      %1562 = vmatprep.subr.mxu0 0.0
      %1563 = vmatpush2.msra.mxu0 0.0
      %1564 = vmatprep.subr.mxu0 0.0
      %1565 = vmatpush2.msra.mxu0 0.0
      %1566 = vmatprep.subr.mxu0 0.0
      %1567 = vmatpush2.msra.mxu0 0.0
      %1568 = vmatprep.subr.mxu0 0.0
      %1569 = vmatpush2.msra.mxu0 0.0
      %1570 = vmatprep.subr.mxu0 0.0
      %1571 = vmatpush2.msra.mxu0 0.0
      %1572 = vmatprep.subr.mxu0 0.0
      %1573 = vmatpush2.msra.mxu0 0.0
      %1574 = vmatprep.subr.mxu0 0.0
      %1575 = vmatpush2.msra.mxu0 0.0
      %1576 = vmatprep.mubr.f32.mxu0 0.0
      %1577 = vmatmul.mubr.f32.gmra.mxu0 %v1508
      %v1578 = vpop.f32.mrf.mxu0
      %v1579 = vadd.f32 0.0, %v1578
      %v1580 = vpop.f32.mrf.mxu0
      %1581 = vdwg.mxu0
      %v1582 = vadd.f32 %v1511, %v1579
      %1583 = vst [vmem:[%s1510] sm:$0xff] %v1582
    $region58: #{bilstm_crf_loss.1} parent=1 // loop_footer
      %s1055 = sadd.s32 1, %s1051
    $region59: #{bilstm_crf_loss.1} parent=1 // loop_footer_branch
      %1050 = sbr.rel target = $region55
    $region60: #{bilstm_crf_loss.1} parent=1 // loop_exit
      _
    %v1584 = vld [vmem:[%s11] sm:$0xff]
    %v1585 = vlaneseq
    %v1586 = vand.u32 %v1585, 127
    %vm1587 = vcmp.eq.s32.totalorder %v1586, 0
    %v1588 = vsel %vm1587, 0.0, -10000.0
    loop: start=0, step=1, limit=8
    $region61: #{bilstm_crf_loss.1} parent=1 // loop_pre_header
      _
    $region62: #{bilstm_crf_loss.1} parent=1 // loop_header
      %s1590 = sphi 0, %s1594
      %p1591 = scmp.ge.s32.totalorder %s1590, 8
      %v1595 = vphi %v1588, %v1890
    $region63: #{bilstm_crf_loss.1} parent=1 // loop_header_branch
      %1593 = sbr.rel (%p1591) target = $region67
    $region64: #{bilstm_crf_loss.1} parent=1 // loop_body
      %s1596 = smul.u32 %s1590, 8
      %s1597 = scalar_lea.vmem %s12, %s1596
      %v1598 = vld [vmem:[%s1597] sm:$0xff]
      %v1600 = vcombine.high %v1595, %v1595
      %v1602 = vunpack.c.l.s4 1966171168
      %v1603 = vunpack.c.0.s8 %v1602
      %v1604 = vlaneseq
      %v1605 = vshrl.u32 %v1604, 7
      %v1606 = vsub.s32 %v1603, %v1605
      %v1607 = vrot.slane %v1595, %v1606
      %v1609 = vunpack.c.l.s4 1966171168
      %v1610 = vunpack.c.0.s8 %v1609
      %v1611 = vlaneseq
      %v1612 = vshrl.u32 %v1611, 7
      %v1613 = vsub.s32 %v1610, %v1612
      %v1614 = vrot.slane %v1600, %v1613
      %v1615 = vcombine.high %v1607, %v1607
      %v1616 = vcombine.high %v1614, %v1614
      %v1618 = vunpack.c.l.s4 1966171168
      %v1619 = vunpack.c.0.s8 %v1618
      %v1620 = vlaneseq
      %v1621 = vshrl.u32 %v1620, 7
      %v1622 = vsub.s32 %v1619, %v1621
      %v1623 = vrot.slane %v1607, %v1622
      %v1625 = vunpack.c.l.s4 1966171168
      %v1626 = vunpack.c.0.s8 %v1625
      %v1627 = vlaneseq
      %v1628 = vshrl.u32 %v1627, 7
      %v1629 = vsub.s32 %v1626, %v1628
      %v1630 = vrot.slane %v1614, %v1629
      %v1632 = vunpack.c.l.s4 1966171168
      %v1633 = vunpack.c.0.s8 %v1632
      %v1634 = vlaneseq
      %v1635 = vshrl.u32 %v1634, 7
      %v1636 = vsub.s32 %v1633, %v1635
      %v1637 = vrot.slane %v1615, %v1636
      %v1639 = vunpack.c.l.s4 1966171168
      %v1640 = vunpack.c.0.s8 %v1639
      %v1641 = vlaneseq
      %v1642 = vshrl.u32 %v1641, 7
      %v1643 = vsub.s32 %v1640, %v1642
      %v1644 = vrot.slane %v1616, %v1643
      %v1645 = vcombine.high %v1623, %v1623
      %v1646 = vcombine.high %v1630, %v1630
      %v1647 = vcombine.high %v1637, %v1637
      %v1648 = vcombine.high %v1644, %v1644
      %v1649 = vlaneseq
      %v1650 = vshrl.u32 %v1649, 7
      %v1651 = vsub.s32 0, %v1650
      %v1652 = vrot.slane %v1623, %v1651
      %v1653 = vlaneseq
      %v1654 = vshrl.u32 %v1653, 7
      %v1655 = vsub.s32 0, %v1654
      %v1656 = vrot.slane %v1637, %v1655
      %v1657 = vlaneseq
      %v1658 = vshrl.u32 %v1657, 7
      %v1659 = vsub.s32 0, %v1658
      %v1660 = vrot.slane %v1645, %v1659
      %v1661 = vlaneseq
      %v1662 = vshrl.u32 %v1661, 7
      %v1663 = vsub.s32 0, %v1662
      %v1664 = vrot.slane %v1647, %v1663
      %v1665 = vlaneseq
      %v1666 = vshrl.u32 %v1665, 7
      %v1667 = vsub.s32 0, %v1666
      %v1668 = vrot.slane %v1630, %v1667
      %v1669 = vlaneseq
      %v1670 = vshrl.u32 %v1669, 7
      %v1671 = vsub.s32 0, %v1670
      %v1672 = vrot.slane %v1644, %v1671
      %v1673 = vlaneseq
      %v1674 = vshrl.u32 %v1673, 7
      %v1675 = vsub.s32 0, %v1674
      %v1676 = vrot.slane %v1646, %v1675
      %v1677 = vlaneseq
      %v1678 = vshrl.u32 %v1677, 7
      %v1679 = vsub.s32 0, %v1678
      %v1680 = vrot.slane %v1648, %v1679
      %v1689 = vadd.f32 %v1652, %v1584
      %v1690 = vadd.f32 %v1656, %v1584
      %v1691 = vadd.f32 %v1660, %v1584
      %v1692 = vadd.f32 %v1664, %v1584
      %v1693 = vadd.f32 %v1668, %v1584
      %v1694 = vadd.f32 %v1672, %v1584
      %v1695 = vadd.f32 %v1676, %v1584
      %v1696 = vadd.f32 %v1680, %v1584
      %vm1697 = vcmask 64512
      %v1698 = vsel %vm1697, %v1689, -inf
      %1699 = vmax.xlane.f32.xlu0 %v1698
      %v1700 = vpop.xlane.xlu0 %1699
      %v1701 = vsel %vm1697, %v1690, -inf
      %1702 = vmax.xlane.f32.xlu0 %v1701
      %v1703 = vpop.xlane.xlu0 %1702
      %v1704 = vsel %vm1697, %v1691, -inf
      %1705 = vmax.xlane.f32.xlu0 %v1704
      %v1706 = vpop.xlane.xlu0 %1705
      %v1707 = vsel %vm1697, %v1692, -inf
      %1708 = vmax.xlane.f32.xlu0 %v1707
      %v1709 = vpop.xlane.xlu0 %1708
      %v1710 = vsel %vm1697, %v1693, -inf
      %1711 = vmax.xlane.f32.xlu0 %v1710
      %v1712 = vpop.xlane.xlu0 %1711
      %v1713 = vsel %vm1697, %v1694, -inf
      %1714 = vmax.xlane.f32.xlu0 %v1713
      %v1715 = vpop.xlane.xlu0 %1714
      %v1716 = vsel %vm1697, %v1695, -inf
      %1717 = vmax.xlane.f32.xlu0 %v1716
      %v1718 = vpop.xlane.xlu0 %1717
      %v1719 = vsel %vm1697, %v1696, -inf
      %1720 = vmax.xlane.f32.xlu0 %v1719
      %v1721 = vpop.xlane.xlu0 %1720
      %v1722 = vsub.f32 %v1689, %v1700
      %v1723 = vsub.f32 %v1690, %v1703
      %v1724 = vsub.f32 %v1691, %v1706
      %v1725 = vsub.f32 %v1692, %v1709
      %v1726 = vsub.f32 %v1693, %v1712
      %v1727 = vsub.f32 %v1694, %v1715
      %v1728 = vsub.f32 %v1695, %v1718
      %v1729 = vsub.f32 %v1696, %v1721
      %v1730 = vmul.f32 %v1722, 1.442695
      %v1731 = vpow.pop %v1730
      %v1732 = vmul.f32 %v1723, 1.442695
      %v1733 = vpow.pop %v1732
      %v1734 = vmul.f32 %v1724, 1.442695
      %v1735 = vpow.pop %v1734
      %v1736 = vmul.f32 %v1725, 1.442695
      %v1737 = vpow.pop %v1736
      %v1738 = vmul.f32 %v1726, 1.442695
      %v1739 = vpow.pop %v1738
      %v1740 = vmul.f32 %v1727, 1.442695
      %v1741 = vpow.pop %v1740
      %v1742 = vmul.f32 %v1728, 1.442695
      %v1743 = vpow.pop %v1742
      %v1744 = vmul.f32 %v1729, 1.442695
      %v1745 = vpow.pop %v1744
      %v1746 = vsel %vm1697, %v1731, 0.0
      %1747 = vadd.xlane.f32.xlu0 %v1746
      %v1748 = vpop.xlane.xlu0 %1747
      %v1749 = vsel %vm1697, %v1733, 0.0
      %1750 = vadd.xlane.f32.xlu0 %v1749
      %v1751 = vpop.xlane.xlu0 %1750
      %v1752 = vsel %vm1697, %v1735, 0.0
      %1753 = vadd.xlane.f32.xlu0 %v1752
      %v1754 = vpop.xlane.xlu0 %1753
      %v1755 = vsel %vm1697, %v1737, 0.0
      %1756 = vadd.xlane.f32.xlu0 %v1755
      %v1757 = vpop.xlane.xlu0 %1756
      %v1758 = vsel %vm1697, %v1739, 0.0
      %1759 = vadd.xlane.f32.xlu0 %v1758
      %v1760 = vpop.xlane.xlu0 %1759
      %v1761 = vsel %vm1697, %v1741, 0.0
      %1762 = vadd.xlane.f32.xlu0 %v1761
      %v1763 = vpop.xlane.xlu0 %1762
      %v1764 = vsel %vm1697, %v1743, 0.0
      %1765 = vadd.xlane.f32.xlu0 %v1764
      %v1766 = vpop.xlane.xlu0 %1765
      %v1767 = vsel %vm1697, %v1745, 0.0
      %1768 = vadd.xlane.f32.xlu0 %v1767
      %v1769 = vpop.xlane.xlu0 %1768
      %v1778 = vlaneseq
      %v1779 = vshrl.u32 %v1778, 7
      %v1780 = vsub.s32 %v1586, %v1779
      %v1781 = vrot.slane %v1700, %v1780
      %v1782 = vlaneseq
      %v1783 = vshrl.u32 %v1782, 7
      %v1784 = vsub.s32 %v1586, %v1783
      %v1785 = vrot.slane %v1703, %v1784
      %v1786 = vlaneseq
      %v1787 = vshrl.u32 %v1786, 7
      %v1788 = vsub.s32 %v1586, %v1787
      %v1789 = vrot.slane %v1706, %v1788
      %v1790 = vlaneseq
      %v1791 = vshrl.u32 %v1790, 7
      %v1792 = vsub.s32 %v1586, %v1791
      %v1793 = vrot.slane %v1709, %v1792
      %v1794 = vlaneseq
      %v1795 = vshrl.u32 %v1794, 7
      %v1796 = vsub.s32 %v1586, %v1795
      %v1797 = vrot.slane %v1712, %v1796
      %v1798 = vlaneseq
      %v1799 = vshrl.u32 %v1798, 7
      %v1800 = vsub.s32 %v1586, %v1799
      %v1801 = vrot.slane %v1715, %v1800
      %v1802 = vlaneseq
      %v1803 = vshrl.u32 %v1802, 7
      %v1804 = vsub.s32 %v1586, %v1803
      %v1805 = vrot.slane %v1718, %v1804
      %v1806 = vlaneseq
      %v1807 = vshrl.u32 %v1806, 7
      %v1808 = vsub.s32 %v1586, %v1807
      %v1809 = vrot.slane %v1721, %v1808
      %vm1810 = vcmask 1041409
      %v1811 = vsel %vm1810, %v1785, %v1781
      %vm1812 = vcmask 1042434
      %v1813 = vsel %vm1812, %v1789, %v1811
      %vm1814 = vcmask 1043459
      %v1815 = vsel %vm1814, %v1793, %v1813
      %vm1816 = vcmask 1044484
      %v1817 = vsel %vm1816, %v1797, %v1815
      %vm1818 = vcmask 1045509
      %v1819 = vsel %vm1818, %v1801, %v1817
      %vm1820 = vcmask 1046534
      %v1821 = vsel %vm1820, %v1805, %v1819
      %vm1822 = vcmask 1047559
      %v1823 = vsel %vm1822, %v1809, %v1821
      %v1825 = vadd.f32 %v1598, %v1823
      %v1826 = vlog2.pop %v1748
      %v1827 = vmul.f32 %v1826, 0.6931472
      %v1828 = vlog2.pop %v1751
      %v1829 = vmul.f32 %v1828, 0.6931472
      %v1830 = vlog2.pop %v1754
      %v1831 = vmul.f32 %v1830, 0.6931472
      %v1832 = vlog2.pop %v1757
      %v1833 = vmul.f32 %v1832, 0.6931472
      %v1834 = vlog2.pop %v1760
      %v1835 = vmul.f32 %v1834, 0.6931472
      %v1836 = vlog2.pop %v1763
      %v1837 = vmul.f32 %v1836, 0.6931472
      %v1838 = vlog2.pop %v1766
      %v1839 = vmul.f32 %v1838, 0.6931472
      %v1840 = vlog2.pop %v1769
      %v1841 = vmul.f32 %v1840, 0.6931472
      %v1850 = vlaneseq
      %v1851 = vshrl.u32 %v1850, 7
      %v1852 = vsub.s32 %v1586, %v1851
      %v1853 = vrot.slane %v1827, %v1852
      %v1854 = vlaneseq
      %v1855 = vshrl.u32 %v1854, 7
      %v1856 = vsub.s32 %v1586, %v1855
      %v1857 = vrot.slane %v1829, %v1856
      %v1858 = vlaneseq
      %v1859 = vshrl.u32 %v1858, 7
      %v1860 = vsub.s32 %v1586, %v1859
      %v1861 = vrot.slane %v1831, %v1860
      %v1862 = vlaneseq
      %v1863 = vshrl.u32 %v1862, 7
      %v1864 = vsub.s32 %v1586, %v1863
      %v1865 = vrot.slane %v1833, %v1864
      %v1866 = vlaneseq
      %v1867 = vshrl.u32 %v1866, 7
      %v1868 = vsub.s32 %v1586, %v1867
      %v1869 = vrot.slane %v1835, %v1868
      %v1870 = vlaneseq
      %v1871 = vshrl.u32 %v1870, 7
      %v1872 = vsub.s32 %v1586, %v1871
      %v1873 = vrot.slane %v1837, %v1872
      %v1874 = vlaneseq
      %v1875 = vshrl.u32 %v1874, 7
      %v1876 = vsub.s32 %v1586, %v1875
      %v1877 = vrot.slane %v1839, %v1876
      %v1878 = vlaneseq
      %v1879 = vshrl.u32 %v1878, 7
      %v1880 = vsub.s32 %v1586, %v1879
      %v1881 = vrot.slane %v1841, %v1880
      %v1882 = vsel %vm1810, %v1857, %v1853
      %v1883 = vsel %vm1812, %v1861, %v1882
      %v1884 = vsel %vm1814, %v1865, %v1883
      %v1885 = vsel %vm1816, %v1869, %v1884
      %v1886 = vsel %vm1818, %v1873, %v1885
      %v1887 = vsel %vm1820, %v1877, %v1886
      %v1888 = vsel %vm1822, %v1881, %v1887
      %v1890 = vadd.f32 %v1825, %v1888
    $region65: #{bilstm_crf_loss.1} parent=1 // loop_footer
      %s1594 = sadd.s32 1, %s1590
    $region66: #{bilstm_crf_loss.1} parent=1 // loop_footer_branch
      %1589 = sbr.rel target = $region62
    $region67: #{bilstm_crf_loss.1} parent=1 // loop_exit
      _
    %v1891 = vlaneseq
    %v1892 = vshrl.u32 %v1891, 7
    %v1893 = vsub.s32 1, %v1892
    %v1894 = vrot.slane %v1584, %v1893
    %v1895 = vadd.f32 %v1595, %v1894
    %vm1896 = vcmask 64512
    %v1897 = vsel %vm1896, %v1895, -inf
    %1898 = vmax.xlane.f32.xlu0 %v1897
    %v1899 = vpop.xlane.xlu0 %1898
    %v1900 = vsub.f32 %v1895, %v1899
    %v1901 = vmul.f32 %v1900, 1.442695
    %v1902 = vpow.pop %v1901
    %v1903 = vsel %vm1896, %v1902, 0.0
    %1904 = vadd.xlane.f32.xlu0 %v1903
    %v1905 = vpop.xlane.xlu0 %1904
    %v1906 = vlog2.pop %v1905
    %v1907 = vmul.f32 %v1906, 0.6931472
    %v1908 = vadd.f32 %v1899, %v1907
    %vm1909 = vcmask 7168
    %1910 = vst.msk [vmem:[%s13] sm:$0xff] %vm1909, %v1908
    // Predicated region
    $region68: #{bilstm_crf_loss.1} parent=1 // pred_check
      _
    $region69: #{bilstm_crf_loss.1} parent=1 // pred_check_branch
      %1912 = sbr.rel (0) target = $region71
    $region70: #{bilstm_crf_loss.1} parent=1 // pred_region
      _
    $region71: #{bilstm_crf_loss.1} parent=1 // pred_fallthru
      _
    // Predicated region
    $region72: #{bilstm_crf_loss.1} parent=1 // pred_check
      _
    $region73: #{bilstm_crf_loss.1} parent=1 // pred_check_branch
      %1914 = sbr.rel (0) target = $region75
    $region74: #{bilstm_crf_loss.1} parent=1 // pred_region
      _
    $region75: #{bilstm_crf_loss.1} parent=1 // pred_fallthru
      _
    // Predicated region
    $region76: #{bilstm_crf_loss.1} parent=1 // pred_check
      _
    $region77: #{bilstm_crf_loss.1} parent=1 // pred_check_branch
      %1916 = sbr.rel (0) target = $region79
    $region78: #{bilstm_crf_loss.1} parent=1 // pred_region
      _
    $region79: #{bilstm_crf_loss.1} parent=1 // pred_fallthru
      _
    // Predicated region
    $region80: #{bilstm_crf_loss.1} parent=1 // pred_check
      _
    $region81: #{bilstm_crf_loss.1} parent=1 // pred_check_branch
      %1918 = sbr.rel (0) target = $region83
    $region82: #{bilstm_crf_loss.1} parent=1 // pred_region
      _
    $region83: #{bilstm_crf_loss.1} parent=1 // pred_fallthru
      _
    %1919 = vsyncpa [#allocation5], 1

</llo_original>
